<compile_context>
chip_gen: v7x
topology: tpu7x:2x2x1
jax: 0.10.0
libtpu: 0.0.40
codegen_flags: <defaults>
</compile_context>

<pallas_src>
import jax
import jax.numpy as jnp
from jax.experimental import pallas as pl
from jax.experimental.pallas import tpu as pltpu

D_IN, D_IN_PAD = 784, 896       # 896 = 7 * 128
H1 = 128
H2, H2_PAD = 64, 128
D_OUT, D_OUT_PAD = 10, 128


def mlp_kernel(x_ref, w1_ref, b1_ref, w2_ref, b2_ref, w3_ref, b3_ref, o_ref):
    # hidden1 + ReLU  (bf16 inputs, f32 accumulation)
    h1 = jnp.dot(x_ref[...], w1_ref[...], preferred_element_type=jnp.float32)
    h1 = jnp.maximum(h1 + b1_ref[...], 0.0).astype(jnp.bfloat16)
    # hidden2 + ReLU (padded to 128 lanes; padded cols are exactly 0)
    h2 = jnp.dot(h1, w2_ref[...], preferred_element_type=jnp.float32)
    h2 = jnp.maximum(h2 + b2_ref[...], 0.0).astype(jnp.bfloat16)
    # output layer: padded logits get bias -1e30 -> exp() == 0, softmax exact
    logits = jnp.dot(h2, w3_ref[...], preferred_element_type=jnp.float32) + b3_ref[...]
    m = jnp.max(logits, axis=-1, keepdims=True)
    e = jnp.exp(logits - m)
    denom = jnp.sum(e, axis=-1, keepdims=True)
    o_ref[...] = (e * pl.reciprocal(denom, approx=True)).astype(o_ref.dtype)


def network_forward(x, kparams, *, tb=256):
    """x: [B, 784] float32 -> softmax probs [B, 10] float32.

    kparams: output of prepare_params() (padded, [in,out]-layout, bf16 weights).
    """
    B, d_in = x.shape
    assert d_in == D_IN
    tb = min(tb, B)
    assert B % tb == 0

    w1, b1, w2, b2, w3, b3 = kparams

    # Pad the contraction dim to 896 and cast the activation stream to bf16
    # (halves the dominant HBM byte stream; MXU accumulates in f32).
    xp = jnp.zeros((B, D_IN_PAD), jnp.bfloat16).at[:, :D_IN].set(x.astype(jnp.bfloat16))

    full = lambda i: (0, 0)
    out = pl.pallas_call(
        mlp_kernel,
        out_shape=jax.ShapeDtypeStruct((B, D_OUT_PAD), jnp.float32),
        grid_spec=pl.GridSpec(
            grid=(B // tb,),
            in_specs=[
                pl.BlockSpec((tb, D_IN_PAD), lambda i: (i, 0)),   # x tile (batch-tiled)
                pl.BlockSpec((D_IN_PAD, H1), full),               # W1 (resident)
                pl.BlockSpec((1, H1), full),                      # b1
                pl.BlockSpec((H1, H2_PAD), full),                 # W2
                pl.BlockSpec((1, H2_PAD), full),                  # b2
                pl.BlockSpec((H2_PAD, D_OUT_PAD), full),          # W3
                pl.BlockSpec((1, D_OUT_PAD), full),               # b3
            ],
            out_specs=pl.BlockSpec((tb, D_OUT_PAD), lambda i: (i, 0)),
        ),
        compiler_params=pltpu.CompilerParams(
            dimension_semantics=("parallel",),
        ),
    )(xp, w1, b1, w2, b2, w3, b3)
    return out[:, :D_OUT]


def init_params(key):
    """nn.Linear-style init U(-1/sqrt(fan_in), 1/sqrt(fan_in)); weights returned
    already transposed to [in, out], float32, unpadded."""
    def linear(k, fan_in, fan_out):
        kw, kb = jax.random.split(k)
        bound = 1.0 / jnp.sqrt(fan_in)
        w = jax.random.uniform(kw, (fan_in, fan_out), jnp.float32, -bound, bound)
        b = jax.random.uniform(kb, (1, fan_out), jnp.float32, -bound, bound)
        return w, b

    k1, k2, k3 = jax.random.split(key, 3)
    w1, b1 = linear(k1, D_IN, H1)
    w2, b2 = linear(k2, H1, H2)
    w3, b3 = linear(k3, H2, D_OUT)
    return (w1, b1, w2, b2, w3, b3)


def prepare_params(params):
    """Pad for lane-dense layout and cast weights to bf16 (biases stay f32)."""
    w1, b1, w2, b2, w3, b3 = params
    w1p = jnp.zeros((D_IN_PAD, H1), jnp.float32).at[:D_IN, :].set(w1)
    w2p = jnp.zeros((H1, H2_PAD), jnp.float32).at[:, :H2].set(w2)
    b2p = jnp.zeros((1, H2_PAD), jnp.float32).at[:, :H2].set(b2)
    w3p = jnp.zeros((H2_PAD, D_OUT_PAD), jnp.float32).at[:H2, :D_OUT].set(w3)
    # padded logits must be effectively -inf so they vanish in the softmax
    b3p = jnp.full((1, D_OUT_PAD), -1e30, jnp.float32).at[:, :D_OUT].set(b3)
    return (
        w1p.astype(jnp.bfloat16), b1,
        w2p.astype(jnp.bfloat16), b2p,
        w3p.astype(jnp.bfloat16), b3p,
    )


def _reference(x, params):
    """Pure f32 reference matching the PyTorch module's forward."""
    w1, b1, w2, b2, w3, b3 = params
    h1 = jnp.maximum(x @ w1 + b1, 0.0)
    h2 = jnp.maximum(h1 @ w2 + b2, 0.0)
    return jax.nn.softmax(h2 @ w3 + b3, axis=1)


if __name__ == "__main__":
    key = jax.random.PRNGKey(0)
    kx, kp = jax.random.split(key)

    # B=512 with tb=256 -> grid (2,): fills the MXU M dimension and gives
    # both v7x TensorCores a batch shard (harmless single-step on v5e/v6e).
    B = 512
    x = jax.random.normal(kx, (B, D_IN), jnp.float32)
    params = init_params(kp)
    kparams = prepare_params(params)

    out = network_forward(x, kparams, tb=256)
    out = jax.block_until_ready(out)

    ref = _reference(x, params)
    assert out.shape == (B, D_OUT)
    # bf16 weights/activations: compare against the f32 reference with a
    # relaxed tolerance (softmax outputs are in [0, 1]).
    assert jnp.allclose(out, ref, atol=2.5e-2, rtol=2.5e-2), (
        float(jnp.max(jnp.abs(out - ref)))
    )

    print("KERNEL_OK")
</pallas_src>

<mosaic_0001>
module attributes {stable_mosaic.version = 11 : i64} {
  func.func @mlp_kernel(%arg0: i32, %arg1: memref<256x896xbf16, #tpu.memory_space<vmem>>, %arg2: memref<896x128xbf16, #tpu.memory_space<vmem>>, %arg3: memref<1x128xf32, #tpu.memory_space<vmem>>, %arg4: memref<128x128xbf16, #tpu.memory_space<vmem>>, %arg5: memref<1x128xf32, #tpu.memory_space<vmem>>, %arg6: memref<128x128xbf16, #tpu.memory_space<vmem>>, %arg7: memref<1x128xf32, #tpu.memory_space<vmem>>, %arg8: memref<256x128xf32, #tpu.memory_space<vmem>>) attributes {dimension_semantics = [#tpu.dimension_semantics<parallel>], iteration_bounds = array<i64: 2>, scalar_prefetch = 0 : i64, scratch_operands = 0 : i64, tpu.core_type = #tpu.core_type<tc>, window_params = [{transform_indices = @transform_0, window_bounds = array<i64: 256, 896>}, {pipeline_mode = #tpu.pipeline_mode<synchronous>, transform_indices = @transform_1, window_bounds = array<i64: 896, 128>}, {pipeline_mode = #tpu.pipeline_mode<synchronous>, transform_indices = @transform_2, window_bounds = array<i64: 1, 128>}, {pipeline_mode = #tpu.pipeline_mode<synchronous>, transform_indices = @transform_3, window_bounds = array<i64: 128, 128>}, {pipeline_mode = #tpu.pipeline_mode<synchronous>, transform_indices = @transform_4, window_bounds = array<i64: 1, 128>}, {pipeline_mode = #tpu.pipeline_mode<synchronous>, transform_indices = @transform_5, window_bounds = array<i64: 128, 128>}, {pipeline_mode = #tpu.pipeline_mode<synchronous>, transform_indices = @transform_6, window_bounds = array<i64: 1, 128>}, {transform_indices = @transform_7, window_bounds = array<i64: 256, 128>}]} {
    %c0 = arith.constant 0 : index
    %c0_0 = arith.constant 0 : index
    %0 = vector.load %arg1[%c0, %c0_0] : memref<256x896xbf16, #tpu.memory_space<vmem>>, vector<256x896xbf16>
    %c0_1 = arith.constant 0 : index
    %c0_2 = arith.constant 0 : index
    %1 = vector.load %arg2[%c0_1, %c0_2] : memref<896x128xbf16, #tpu.memory_space<vmem>>, vector<896x128xbf16>
    %cst = arith.constant dense<0.000000e+00> : vector<256x128xf32>
    %2 = tpu.matmul %0, %1, %cst {dimension_numbers = #tpu.dot_dimension_numbers<[1], [0], [0], [1], [0, 0, 1, 1], [], []>} : vector<256x896xbf16>, vector<896x128xbf16>, vector<256x128xf32> -> vector<256x128xf32>
    %c0_3 = arith.constant 0 : index
    %c0_4 = arith.constant 0 : index
    %3 = vector.load %arg3[%c0_3, %c0_4] : memref<1x128xf32, #tpu.memory_space<vmem>>, vector<1x128xf32>
    %4 = vector.broadcast %3 : vector<1x128xf32> to vector<256x128xf32>
    %5 = arith.addf %2, %4 : vector<256x128xf32>
    %cst_5 = arith.constant 0.000000e+00 : f32
    %6 = vector.broadcast %cst_5 : f32 to vector<256x128xf32>
    %7 = arith.maximumf %5, %6 : vector<256x128xf32>
    %8 = arith.truncf %7 : vector<256x128xf32> to vector<256x128xbf16>
    %c0_6 = arith.constant 0 : index
    %c0_7 = arith.constant 0 : index
    %9 = vector.load %arg4[%c0_6, %c0_7] : memref<128x128xbf16, #tpu.memory_space<vmem>>, vector<128x128xbf16>
    %cst_8 = arith.constant dense<0.000000e+00> : vector<256x128xf32>
    %10 = tpu.matmul %8, %9, %cst_8 {dimension_numbers = #tpu.dot_dimension_numbers<[1], [0], [0], [1], [0, 0, 1, 1], [], []>} : vector<256x128xbf16>, vector<128x128xbf16>, vector<256x128xf32> -> vector<256x128xf32>
    %c0_9 = arith.constant 0 : index
    %c0_10 = arith.constant 0 : index
    %11 = vector.load %arg5[%c0_9, %c0_10] : memref<1x128xf32, #tpu.memory_space<vmem>>, vector<1x128xf32>
    %12 = vector.broadcast %11 : vector<1x128xf32> to vector<256x128xf32>
    %13 = arith.addf %10, %12 : vector<256x128xf32>
    %cst_11 = arith.constant 0.000000e+00 : f32
    %14 = vector.broadcast %cst_11 : f32 to vector<256x128xf32>
    %15 = arith.maximumf %13, %14 : vector<256x128xf32>
    %16 = arith.truncf %15 : vector<256x128xf32> to vector<256x128xbf16>
    %c0_12 = arith.constant 0 : index
    %c0_13 = arith.constant 0 : index
    %17 = vector.load %arg6[%c0_12, %c0_13] : memref<128x128xbf16, #tpu.memory_space<vmem>>, vector<128x128xbf16>
    %cst_14 = arith.constant dense<0.000000e+00> : vector<256x128xf32>
    %18 = tpu.matmul %16, %17, %cst_14 {dimension_numbers = #tpu.dot_dimension_numbers<[1], [0], [0], [1], [0, 0, 1, 1], [], []>} : vector<256x128xbf16>, vector<128x128xbf16>, vector<256x128xf32> -> vector<256x128xf32>
    %c0_15 = arith.constant 0 : index
    %c0_16 = arith.constant 0 : index
    %19 = vector.load %arg7[%c0_15, %c0_16] : memref<1x128xf32, #tpu.memory_space<vmem>>, vector<1x128xf32>
    %20 = vector.broadcast %19 : vector<1x128xf32> to vector<256x128xf32>
    %21 = arith.addf %18, %20 : vector<256x128xf32>
    %cst_17 = arith.constant dense<0xFF800000> : vector<256xf32>
    %22 = vector.multi_reduction <maximumf>, %21, %cst_17 [1] : vector<256x128xf32> to vector<256xf32>
    %23 = vector.shape_cast %22 : vector<256xf32> to vector<256x1xf32>
    %24 = vector.broadcast %23 : vector<256x1xf32> to vector<256x128xf32>
    %25 = arith.subf %21, %24 : vector<256x128xf32>
    %26 = math.exp %25 : vector<256x128xf32>
    %cst_18 = arith.constant dense<0.000000e+00> : vector<256xf32>
    %27 = vector.multi_reduction <add>, %26, %cst_18 [1] : vector<256x128xf32> to vector<256xf32>
    %28 = vector.shape_cast %27 : vector<256xf32> to vector<256x1xf32>
    %29 = tpu.reciprocal %28 {approx = true} : vector<256x1xf32> -> vector<256x1xf32>
    %30 = vector.broadcast %29 : vector<256x1xf32> to vector<256x128xf32>
    %31 = arith.mulf %26, %30 : vector<256x128xf32>
    %c0_19 = arith.constant 0 : index
    %c0_20 = arith.constant 0 : index
    %32 = vector.load %arg8[%c0_19, %c0_20] : memref<256x128xf32, #tpu.memory_space<vmem>>, vector<256x128xf32>
    tpu.vector_store %arg8[%c0_19, %c0_20], %31 {strides = array<i32>} : memref<256x128xf32, #tpu.memory_space<vmem>>, vector<256x128xf32>,
    return
  }
  func.func @transform_0(%arg0: i32) -> (i32, i32) {
    %c0_i32 = arith.constant 0 : i32
    %c0_i32_0 = arith.constant 0 : i32
    return %arg0, %c0_i32 : i32, i32
  }
  func.func @transform_1(%arg0: i32) -> (i32, i32) {
    %c0_i32 = arith.constant 0 : i32
    %c0_i32_0 = arith.constant 0 : i32
    %c0_i32_1 = arith.constant 0 : i32
    return %c0_i32, %c0_i32_0 : i32, i32
  }
  func.func @transform_2(%arg0: i32) -> (i32, i32) {
    %c0_i32 = arith.constant 0 : i32
    %c0_i32_0 = arith.constant 0 : i32
    %c0_i32_1 = arith.constant 0 : i32
    return %c0_i32, %c0_i32_0 : i32, i32
  }
  func.func @transform_3(%arg0: i32) -> (i32, i32) {
    %c0_i32 = arith.constant 0 : i32
    %c0_i32_0 = arith.constant 0 : i32
    %c0_i32_1 = arith.constant 0 : i32
    return %c0_i32, %c0_i32_0 : i32, i32
  }
  func.func @transform_4(%arg0: i32) -> (i32, i32) {
    %c0_i32 = arith.constant 0 : i32
    %c0_i32_0 = arith.constant 0 : i32
    %c0_i32_1 = arith.constant 0 : i32
    return %c0_i32, %c0_i32_0 : i32, i32
  }
  func.func @transform_5(%arg0: i32) -> (i32, i32) {
    %c0_i32 = arith.constant 0 : i32
    %c0_i32_0 = arith.constant 0 : i32
    %c0_i32_1 = arith.constant 0 : i32
    return %c0_i32, %c0_i32_0 : i32, i32
  }
  func.func @transform_6(%arg0: i32) -> (i32, i32) {
    %c0_i32 = arith.constant 0 : i32
    %c0_i32_0 = arith.constant 0 : i32
    %c0_i32_1 = arith.constant 0 : i32
    return %c0_i32, %c0_i32_0 : i32, i32
  }
  func.func @transform_7(%arg0: i32) -> (i32, i32) {
    %c0_i32 = arith.constant 0 : i32
    %c0_i32_0 = arith.constant 0 : i32
    return %arg0, %c0_i32 : i32, i32
  }
}

</mosaic_0001>

<llo_original>
// kernel: tpu_custom_call.1
$region0: #{tpu_custom_call.1}
  #allocation0 [shape = 'u32[]', space=smem, size = 0x4, offset = 0x4, fixed_abs, tag = 'smem constant byte address 0x4 - core index']
  #allocation1 [shape = 'u32[144,128]{1,0:T(1,128)}', space=vmem, size = 0x12000, scoped, tag = 'internal scratch']
  %s0 = inlined_call_operand.hbm [shape: bf16[512,896], index: 0, kind: input, shape index: {}]
  %s1 = inlined_call_operand.hbm [shape: bf16[896,128], index: 1, kind: input, shape index: {}]
  %s2 = inlined_call_operand.vmem [shape: f32[1,128], index: 2, kind: input, shape index: {}]
  %s3 = inlined_call_operand.hbm [shape: bf16[128,128], index: 3, kind: input, shape index: {}]
  %s4 = inlined_call_operand.vmem [shape: f32[1,128], index: 4, kind: input, shape index: {}]
  %s5 = inlined_call_operand.hbm [shape: bf16[128,128], index: 5, kind: input, shape index: {}]
  %s6 = inlined_call_operand.vmem [shape: f32[1,128], index: 6, kind: input, shape index: {}]
  %s7 = inlined_call_operand.hbm [shape: f32[512,128], index: 7, kind: output, shape index: {}]
  %s8 = sld [smem:[#allocation0]]
  $region77: #{tpu_custom_call.1} parent=0
    _
  %s10 = ssub.s32 1, %s8
  %s11 = scalar_select 0, %s10, %s8
  $region1: #{tpu_custom_call.1} parent=0
    #allocation2 [shape = 'u8[917504]{0}', space=vmem, size = 0xe0000, scoped, tag = 'input window, operand 0']
    #allocation3 [shape = 's32[2]{0}', space=sflag, size = 0x8, scoped, tag = 'scoped memory for tpu_custom_call.1']
    #allocation4 [shape = 's32[2]{0}', space=sflag, size = 0x8, scoped, tag = 'scoped memory for tpu_custom_call.1']
    #allocation5 [shape = 'u8[229376]{0}', space=vmem, size = 0x38000, scoped, tag = 'input window, operand 1, single buffered']
    #allocation6 [shape = 's32[1]{0}', space=sflag, size = 0x4, scoped, tag = 'scoped memory for tpu_custom_call.1']
    #allocation7 [shape = 'u8[32768]{0}', space=vmem, size = 0x8000, scoped, tag = 'input window, operand 3, single buffered']
    #allocation8 [shape = 'u8[32768]{0}', space=vmem, size = 0x8000, scoped, tag = 'input window, operand 5, single buffered']
    #allocation9 [shape = 's32[1]{0}', space=sflag, size = 0x4, scoped, tag = 'scoped memory for tpu_custom_call.1']
    #allocation10 [shape = 'u8[262144]{0}', space=vmem, size = 0x40000, scoped, tag = 'output window, operand 0']
    %12 = vsyncpa [#allocation3], 0
    %s13 = scalar_lea.sflag [#allocation3], 1
    %14 = vsyncpa %s13, 0
    %15 = vsyncpa [#allocation6], 0
    %16 = vsyncpa [#allocation9], 0
    %17 = vsyncpa [#allocation4], 0
    %s18 = scalar_lea.sflag [#allocation4], 1
    %19 = vsyncpa %s18, 0
    loop: start=0, step=1, limit=4
    $region2: #{tpu_custom_call.1} parent=1 // loop_pre_header
      _
    $region3: #{tpu_custom_call.1} parent=1 // loop_header
      %s21 = sphi 0, %s25
      %p22 = scmp.ge.s32.totalorder %s21, 4
      %s31 = sphi 0, %s33
      %s34 = sphi 0, %s31
      %s35 = sphi 0, %s34
      %s51 = sphi 0, %s35
      %s55 = sphi 0, %s55
      %s57 = sphi 0, %s55
      %s58 = sphi 0, %s57
      %s72 = sphi 0, %s58
      %s76 = sphi 0, %s76
      %s78 = sphi 0, %s76
      %s79 = sphi 0, %s78
      %s93 = sphi 0, %s79
      %s97 = sphi 0, %s97
      %s99 = sphi 0, %s97
      %s100 = sphi 0, %s99
      %s114 = sphi 0, %s100
      %s118 = sphi 0, %s118
      %s120 = sphi 0, %s118
      %s121 = sphi 0, %s120
      %s135 = sphi 0, %s121
      %s139 = sphi 0, %s139
      %s141 = sphi 0, %s139
      %s142 = sphi 0, %s141
      %s156 = sphi 0, %s142
      %s160 = sphi 0, %s160
      %s162 = sphi 0, %s160
      %s163 = sphi 0, %s162
      %s177 = sphi 0, %s163
      %s183 = sphi 0, %s185
      %s186 = sphi 0, %s183
      %s187 = sphi 0, %s186
      %s203 = sphi 0, %s187
    $region4: #{tpu_custom_call.1} parent=1 // loop_header_branch
      %24 = sbr.rel (%p22) target = $region8
    $region5: #{tpu_custom_call.1} parent=1 // loop_body
      %s26 = ssub.s32 %s21, 1
      %s27 = ssub.s32 %s21, 2
      %s28 = sadd.s32 %s21, 1
      %s29 = ssub.s32 %s21, %s28
      %p30 = scmp.eq.s32.totalorder %s29, 0
      %s32 = sadd.s32 %s31, 1
      %s33 = scalar_select %p30, %s31, %s32
      %p36 = pneg %p30
      %p37 = scmp.eq.s32.totalorder %s21, 1
      %p38 = por %p36, %p37
      %p39 = scmp.ne.s32.totalorder %s31, %s34
      %p40 = scmp.eq.s32.totalorder %s21, 0
      %p41 = por %p39, %p40
      %p42 = scmp.ne.s32.totalorder %s31, %s34
      %p43 = scmp.eq.s32.totalorder %s26, 1
      %p44 = por %p42, %p43
      %p45 = scmp.ne.s32.totalorder %s34, %s35
      %p46 = scmp.eq.s32.totalorder %s26, 0
      %p47 = por %p45, %p46
      %p48 = scmp.ne.s32.totalorder %s34, %s35
      %p49 = scmp.eq.s32.totalorder %s27, 1
      %p50 = por %p48, %p49
      %p52 = scmp.ne.s32.totalorder %s35, %s51
      %p53 = scmp.eq.s32.totalorder %s27, 0
      %p54 = por %p52, %p53
      %s56 = sadd.s32 %s55, 1
      %p59 = scmp.eq.s32.totalorder %s21, 1
      %p60 = scmp.ne.s32.totalorder %s55, %s57
      %p61 = scmp.eq.s32.totalorder %s21, 0
      %p62 = por %p60, %p61
      %p63 = scmp.ne.s32.totalorder %s55, %s57
      %p64 = scmp.eq.s32.totalorder %s26, 1
      %p65 = por %p63, %p64
      %p66 = scmp.ne.s32.totalorder %s57, %s58
      %p67 = scmp.eq.s32.totalorder %s26, 0
      %p68 = por %p66, %p67
      %p69 = scmp.ne.s32.totalorder %s57, %s58
      %p70 = scmp.eq.s32.totalorder %s27, 1
      %p71 = por %p69, %p70
      %p73 = scmp.ne.s32.totalorder %s58, %s72
      %p74 = scmp.eq.s32.totalorder %s27, 0
      %p75 = por %p73, %p74
      %s77 = sadd.s32 %s76, 1
      %p80 = scmp.eq.s32.totalorder %s21, 1
      %p81 = scmp.ne.s32.totalorder %s76, %s78
      %p82 = scmp.eq.s32.totalorder %s21, 0
      %p83 = por %p81, %p82
      %p84 = scmp.ne.s32.totalorder %s76, %s78
      %p85 = scmp.eq.s32.totalorder %s26, 1
      %p86 = por %p84, %p85
      %p87 = scmp.ne.s32.totalorder %s78, %s79
      %p88 = scmp.eq.s32.totalorder %s26, 0
      %p89 = por %p87, %p88
      %p90 = scmp.ne.s32.totalorder %s78, %s79
      %p91 = scmp.eq.s32.totalorder %s27, 1
      %p92 = por %p90, %p91
      %p94 = scmp.ne.s32.totalorder %s79, %s93
      %p95 = scmp.eq.s32.totalorder %s27, 0
      %p96 = por %p94, %p95
      %s98 = sadd.s32 %s97, 1
      %p101 = scmp.eq.s32.totalorder %s21, 1
      %p102 = scmp.ne.s32.totalorder %s97, %s99
      %p103 = scmp.eq.s32.totalorder %s21, 0
      %p104 = por %p102, %p103
      %p105 = scmp.ne.s32.totalorder %s97, %s99
      %p106 = scmp.eq.s32.totalorder %s26, 1
      %p107 = por %p105, %p106
      %p108 = scmp.ne.s32.totalorder %s99, %s100
      %p109 = scmp.eq.s32.totalorder %s26, 0
      %p110 = por %p108, %p109
      %p111 = scmp.ne.s32.totalorder %s99, %s100
      %p112 = scmp.eq.s32.totalorder %s27, 1
      %p113 = por %p111, %p112
      %p115 = scmp.ne.s32.totalorder %s100, %s114
      %p116 = scmp.eq.s32.totalorder %s27, 0
      %p117 = por %p115, %p116
      %s119 = sadd.s32 %s118, 1
      %p122 = scmp.eq.s32.totalorder %s21, 1
      %p123 = scmp.ne.s32.totalorder %s118, %s120
      %p124 = scmp.eq.s32.totalorder %s21, 0
      %p125 = por %p123, %p124
      %p126 = scmp.ne.s32.totalorder %s118, %s120
      %p127 = scmp.eq.s32.totalorder %s26, 1
      %p128 = por %p126, %p127
      %p129 = scmp.ne.s32.totalorder %s120, %s121
      %p130 = scmp.eq.s32.totalorder %s26, 0
      %p131 = por %p129, %p130
      %p132 = scmp.ne.s32.totalorder %s120, %s121
      %p133 = scmp.eq.s32.totalorder %s27, 1
      %p134 = por %p132, %p133
      %p136 = scmp.ne.s32.totalorder %s121, %s135
      %p137 = scmp.eq.s32.totalorder %s27, 0
      %p138 = por %p136, %p137
      %s140 = sadd.s32 %s139, 1
      %p143 = scmp.eq.s32.totalorder %s21, 1
      %p144 = scmp.ne.s32.totalorder %s139, %s141
      %p145 = scmp.eq.s32.totalorder %s21, 0
      %p146 = por %p144, %p145
      %p147 = scmp.ne.s32.totalorder %s139, %s141
      %p148 = scmp.eq.s32.totalorder %s26, 1
      %p149 = por %p147, %p148
      %p150 = scmp.ne.s32.totalorder %s141, %s142
      %p151 = scmp.eq.s32.totalorder %s26, 0
      %p152 = por %p150, %p151
      %p153 = scmp.ne.s32.totalorder %s141, %s142
      %p154 = scmp.eq.s32.totalorder %s27, 1
      %p155 = por %p153, %p154
      %p157 = scmp.ne.s32.totalorder %s142, %s156
      %p158 = scmp.eq.s32.totalorder %s27, 0
      %p159 = por %p157, %p158
      %s161 = sadd.s32 %s160, 1
      %p164 = scmp.eq.s32.totalorder %s21, 1
      %p165 = scmp.ne.s32.totalorder %s160, %s162
      %p166 = scmp.eq.s32.totalorder %s21, 0
      %p167 = por %p165, %p166
      %p168 = scmp.ne.s32.totalorder %s160, %s162
      %p169 = scmp.eq.s32.totalorder %s26, 1
      %p170 = por %p168, %p169
      %p171 = scmp.ne.s32.totalorder %s162, %s163
      %p172 = scmp.eq.s32.totalorder %s26, 0
      %p173 = por %p171, %p172
      %p174 = scmp.ne.s32.totalorder %s162, %s163
      %p175 = scmp.eq.s32.totalorder %s27, 1
      %p176 = por %p174, %p175
      %p178 = scmp.ne.s32.totalorder %s163, %s177
      %p179 = scmp.eq.s32.totalorder %s27, 0
      %p180 = por %p178, %p179
      %s181 = ssub.s32 %s21, %s28
      %p182 = scmp.eq.s32.totalorder %s181, 0
      %s184 = sadd.s32 %s183, 1
      %s185 = scalar_select %p182, %s183, %s184
      %p188 = pneg %p182
      %p189 = scmp.eq.s32.totalorder %s21, 1
      %p190 = por %p188, %p189
      %p191 = scmp.ne.s32.totalorder %s183, %s186
      %p192 = scmp.eq.s32.totalorder %s21, 0
      %p193 = por %p191, %p192
      %p194 = scmp.ne.s32.totalorder %s183, %s186
      %p195 = scmp.eq.s32.totalorder %s26, 1
      %p196 = por %p194, %p195
      %p197 = scmp.ne.s32.totalorder %s186, %s187
      %p198 = scmp.eq.s32.totalorder %s26, 0
      %p199 = por %p197, %p198
      %p200 = scmp.ne.s32.totalorder %s186, %s187
      %p201 = scmp.eq.s32.totalorder %s27, 1
      %p202 = por %p200, %p201
      %p204 = scmp.ne.s32.totalorder %s187, %s203
      %p205 = scmp.eq.s32.totalorder %s27, 0
      %p206 = por %p204, %p205
      %p207 = scmp.le.s32.totalorder 1, %s21
      %p208 = scmp.lt.s32.totalorder %s21, 3
      %p209 = pnand %p207, %p208
      %p210 = pneg %p209
      // Predicated region
      $region9: #{tpu_custom_call.1} parent=5 // pred_check
        _
      $region10: #{tpu_custom_call.1} parent=5 // pred_check_branch
        %212 = sbr.rel (%p209) target = $region12
      $region11: #{tpu_custom_call.1} parent=5 // pred_region
        %s213 = ssub.s32 %s21, 1
        // Predicated region
        $region13: #{tpu_custom_call.1} parent=11 // pred_check
          %p214 = pneg %p68
        $region14: #{tpu_custom_call.1} parent=11 // pred_check_branch
          %216 = sbr.rel (%p214) target = $region16
        $region15: #{tpu_custom_call.1} parent=11 // pred_region
          %s218 = ssub.s32 7168, 7168
          %219 = vsyncadd [#allocation6], %s218
          %s220 = sshll.u32 [#allocation5], 4
          %s221 = int_to_ptr.vmem [resolvable:$true] %s220
          %226 = dma.hbm_to_vmem [thread:$0]  %s1, 7168, %s221, [#allocation6], 64, 64, 4
        $region16: #{tpu_custom_call.1} parent=11 // pred_fallthru
          _
        // Predicated region
        $region17: #{tpu_custom_call.1} parent=11 // pred_check
          %p227 = pneg %p89
        $region18: #{tpu_custom_call.1} parent=11 // pred_check_branch
          %229 = sbr.rel (%p227) target = $region20
        $region19: #{tpu_custom_call.1} parent=11 // pred_region
          _
        $region20: #{tpu_custom_call.1} parent=11 // pred_fallthru
          _
        // Predicated region
        $region21: #{tpu_custom_call.1} parent=11 // pred_check
          %p230 = pneg %p110
        $region22: #{tpu_custom_call.1} parent=11 // pred_check_branch
          %232 = sbr.rel (%p230) target = $region24
        $region23: #{tpu_custom_call.1} parent=11 // pred_region
          %s234 = ssub.s32 1024, 1024
          %235 = vsyncadd [#allocation6], %s234
          %s236 = sshll.u32 [#allocation7], 4
          %s237 = int_to_ptr.vmem [resolvable:$true] %s236
          %242 = dma.hbm_to_vmem [thread:$0]  %s3, 1024, %s237, [#allocation6], 64, 64, 4
        $region24: #{tpu_custom_call.1} parent=11 // pred_fallthru
          _
        // Predicated region
        $region25: #{tpu_custom_call.1} parent=11 // pred_check
          %p243 = pneg %p131
        $region26: #{tpu_custom_call.1} parent=11 // pred_check_branch
          %245 = sbr.rel (%p243) target = $region28
        $region27: #{tpu_custom_call.1} parent=11 // pred_region
          _
        $region28: #{tpu_custom_call.1} parent=11 // pred_fallthru
          _
        // Predicated region
        $region29: #{tpu_custom_call.1} parent=11 // pred_check
          %p246 = pneg %p152
        $region30: #{tpu_custom_call.1} parent=11 // pred_check_branch
          %248 = sbr.rel (%p246) target = $region32
        $region31: #{tpu_custom_call.1} parent=11 // pred_region
          %s250 = ssub.s32 1024, 1024
          %251 = vsyncadd [#allocation9], %s250
          %s252 = sshll.u32 [#allocation8], 4
          %s253 = int_to_ptr.vmem [resolvable:$true] %s252
          %258 = dma.hbm_to_vmem [thread:$0]  %s5, 1024, %s253, [#allocation9], 64, 64, 4
        $region32: #{tpu_custom_call.1} parent=11 // pred_fallthru
          _
        // Predicated region
        $region33: #{tpu_custom_call.1} parent=11 // pred_check
          %p259 = pneg %p173
        $region34: #{tpu_custom_call.1} parent=11 // pred_check_branch
          %261 = sbr.rel (%p259) target = $region36
        $region35: #{tpu_custom_call.1} parent=11 // pred_region
          _
        $region36: #{tpu_custom_call.1} parent=11 // pred_fallthru
          _
      $region12: #{tpu_custom_call.1} parent=5 // pred_fallthru
        _
      %p262 = scmp.lt.s32.totalorder %s21, 2
      // Predicated region
      $region37: #{tpu_custom_call.1} parent=5 // pred_check
        %p263 = pneg %p262
      $region38: #{tpu_custom_call.1} parent=5 // pred_check_branch
        %265 = sbr.rel (%p263) target = $region40
      $region39: #{tpu_custom_call.1} parent=5 // pred_region
        // Predicated region
        $region41: #{tpu_custom_call.1} parent=39 // pred_check
          %p266 = pneg %p41
        $region42: #{tpu_custom_call.1} parent=39 // pred_check_branch
          %268 = sbr.rel (%p266) target = $region44
        $region43: #{tpu_custom_call.1} parent=39 // pred_region
          %s269 = sand.u32 %s31, 1
          %s270 = scalar_lea.sflag [#allocation3], %s269
          %s271 = sand.u32 %s31, 1
          %s272 = smul.addr %s271, 896
          %s273 = scalar_lea.vmem [#allocation2], %s272
          %s274 = smul.u32 32, %s21
          %s276 = ssub.s32 14336, 14336
          %277 = vsyncadd %s270, %s276
          %s278 = smul.addr %s274, 7
          %s279 = smul.addr %s278, 64
          %s280 = scalar_lea.hbm %s0, %s279
          %s281 = sshll.u32 %s273, 4
          %s282 = int_to_ptr.vmem [resolvable:$true] %s281
          %287 = dma.hbm_to_vmem [thread:$0]  %s280, 14336, %s282, %s270, 448, 448, 28
        $region44: #{tpu_custom_call.1} parent=39 // pred_fallthru
          _
      $region40: #{tpu_custom_call.1} parent=5 // pred_fallthru
        _
      %p288 = scmp.le.s32.totalorder 1, %s21
      %p289 = scmp.lt.s32.totalorder %s21, 3
      %p290 = pnand %p288, %p289
      %p291 = pneg %p290
      // Predicated region
      $region45: #{tpu_custom_call.1} parent=5 // pred_check
        _
      $region46: #{tpu_custom_call.1} parent=5 // pred_check_branch
        %293 = sbr.rel (%p290) target = $region48
      $region47: #{tpu_custom_call.1} parent=5 // pred_region
        %s294 = ssub.s32 %s21, 1
        %s295 = sand.u32 %s34, 1
        %s296 = scalar_lea.sflag [#allocation3], %s295
        %s297 = sand.u32 %s34, 1
        %s298 = smul.addr %s297, 896
        %s299 = scalar_lea.vmem [#allocation2], %s298
        // Predicated region
        $region49: #{tpu_custom_call.1} parent=47 // pred_check
          %p300 = pneg %p47
        $region50: #{tpu_custom_call.1} parent=47 // pred_check_branch
          %302 = sbr.rel (%p300) target = $region52
        $region51: #{tpu_custom_call.1} parent=47 // pred_region
          %303 = dma.done %s296, 14336
        $region52: #{tpu_custom_call.1} parent=47 // pred_fallthru
          _
        // Predicated region
        $region53: #{tpu_custom_call.1} parent=47 // pred_check
          %p304 = pneg %p68
        $region54: #{tpu_custom_call.1} parent=47 // pred_check_branch
          %306 = sbr.rel (%p304) target = $region56
        $region55: #{tpu_custom_call.1} parent=47 // pred_region
          %307 = dma.done [#allocation6], 7168
        $region56: #{tpu_custom_call.1} parent=47 // pred_fallthru
          _
        // Predicated region
        $region57: #{tpu_custom_call.1} parent=47 // pred_check
          %p308 = pneg %p110
        $region58: #{tpu_custom_call.1} parent=47 // pred_check_branch
          %310 = sbr.rel (%p308) target = $region60
        $region59: #{tpu_custom_call.1} parent=47 // pred_region
          %311 = dma.done [#allocation6], 1024
        $region60: #{tpu_custom_call.1} parent=47 // pred_fallthru
          _
        // Predicated region
        $region61: #{tpu_custom_call.1} parent=47 // pred_check
          %p312 = pneg %p152
        $region62: #{tpu_custom_call.1} parent=47 // pred_check_branch
          %314 = sbr.rel (%p312) target = $region64
        $region63: #{tpu_custom_call.1} parent=47 // pred_region
          %315 = dma.done [#allocation9], 1024
        $region64: #{tpu_custom_call.1} parent=47 // pred_fallthru
          _
        %s316 = sand.u32 %s34, 1
        %s317 = scalar_lea.sflag [#allocation3], %s316
        %s318 = sand.u32 %s34, 1
        %s319 = smul.addr %s318, 896
        %s320 = scalar_lea.vmem [#allocation2], %s319
        %p321 = pneg %p47
        %p322 = pneg %p44
        %p323 = pneg %p68
        %p324 = pneg %p65
        %p325 = pneg %p89
        %p326 = pneg %p86
        %p327 = pneg %p110
        %p328 = pneg %p107
        %p329 = pneg %p131
        %p330 = pneg %p128
        %p331 = pneg %p152
        %p332 = pneg %p149
        %p333 = pneg %p173
        %p334 = pneg %p170
        %p335 = pneg %p199
        %p336 = pneg %p196
        %s337 = sand.u32 %s186, 1
        %s338 = scalar_lea.sflag [#allocation4], %s337
        %s339 = sand.u32 %s186, 1
        %s340 = smul.addr %s339, 256
        %s341 = scalar_lea.vmem [#allocation10], %s340
        %s342 = smul.u32 32, %s26
        %s343 = smul.u32 32, %s26
        %v345 = vld [vmem:[%s299] sm:$0xff]
        %v346 = vld [vmem:[%s299 + $0x8] sm:$0xff]
        %v347 = vld [vmem:[%s299 + $0x10] sm:$0xff]
        %v348 = vld [vmem:[%s299 + $0x18] sm:$0xf]
        %v349 = vld [vmem:[%s299 + $0x1c] sm:$0xff]
        %v350 = vld [vmem:[%s299 + $0x24] sm:$0xff]
        %v351 = vld [vmem:[%s299 + $0x2c] sm:$0xff]
        %v352 = vld [vmem:[%s299 + $0x34] sm:$0xf]
        %v353 = vld [vmem:[%s299 + $0x38] sm:$0xff]
        %v354 = vld [vmem:[%s299 + $0x40] sm:$0xff]
        %v355 = vld [vmem:[%s299 + $0x48] sm:$0xff]
        %v356 = vld [vmem:[%s299 + $0x50] sm:$0xf]
        %v357 = vld [vmem:[%s299 + $0x54] sm:$0xff]
        %v358 = vld [vmem:[%s299 + $0x5c] sm:$0xff]
        %v359 = vld [vmem:[%s299 + $0x64] sm:$0xff]
        %v360 = vld [vmem:[%s299 + $0x6c] sm:$0xf]
        %v361 = vld [vmem:[%s299 + $0x70] sm:$0xff]
        %v362 = vld [vmem:[%s299 + $0x78] sm:$0xff]
        %v363 = vld [vmem:[%s299 + $0x80] sm:$0xff]
        %v364 = vld [vmem:[%s299 + $0x88] sm:$0xf]
        %v365 = vld [vmem:[%s299 + $0x8c] sm:$0xff]
        %v366 = vld [vmem:[%s299 + $0x94] sm:$0xff]
        %v367 = vld [vmem:[%s299 + $0x9c] sm:$0xff]
        %v368 = vld [vmem:[%s299 + $0xa4] sm:$0xf]
        %v369 = vld [vmem:[%s299 + $0xa8] sm:$0xff]
        %v370 = vld [vmem:[%s299 + $0xb0] sm:$0xff]
        %v371 = vld [vmem:[%s299 + $0xb8] sm:$0xff]
        %v372 = vld [vmem:[%s299 + $0xc0] sm:$0xf]
        %v373 = vld [vmem:[%s299 + $0xc4] sm:$0xff]
        %v374 = vld [vmem:[%s299 + $0xcc] sm:$0xff]
        %v375 = vld [vmem:[%s299 + $0xd4] sm:$0xff]
        %v376 = vld [vmem:[%s299 + $0xdc] sm:$0xf]
        %v377 = vld [vmem:[%s299 + $0xe0] sm:$0xff]
        %v378 = vld [vmem:[%s299 + $0xe8] sm:$0xff]
        %v379 = vld [vmem:[%s299 + $0xf0] sm:$0xff]
        %v380 = vld [vmem:[%s299 + $0xf8] sm:$0xf]
        %v381 = vld [vmem:[%s299 + $0xfc] sm:$0xff]
        %v382 = vld [vmem:[%s299 + $0x104] sm:$0xff]
        %v383 = vld [vmem:[%s299 + $0x10c] sm:$0xff]
        %v384 = vld [vmem:[%s299 + $0x114] sm:$0xf]
        %v385 = vld [vmem:[%s299 + $0x118] sm:$0xff]
        %v386 = vld [vmem:[%s299 + $0x120] sm:$0xff]
        %v387 = vld [vmem:[%s299 + $0x128] sm:$0xff]
        %v388 = vld [vmem:[%s299 + $0x130] sm:$0xf]
        %v389 = vld [vmem:[%s299 + $0x134] sm:$0xff]
        %v390 = vld [vmem:[%s299 + $0x13c] sm:$0xff]
        %v391 = vld [vmem:[%s299 + $0x144] sm:$0xff]
        %v392 = vld [vmem:[%s299 + $0x14c] sm:$0xf]
        %v393 = vld [vmem:[%s299 + $0x150] sm:$0xff]
        %v394 = vld [vmem:[%s299 + $0x158] sm:$0xff]
        %v395 = vld [vmem:[%s299 + $0x160] sm:$0xff]
        %v396 = vld [vmem:[%s299 + $0x168] sm:$0xf]
        %v397 = vld [vmem:[%s299 + $0x16c] sm:$0xff]
        %v398 = vld [vmem:[%s299 + $0x174] sm:$0xff]
        %v399 = vld [vmem:[%s299 + $0x17c] sm:$0xff]
        %v400 = vld [vmem:[%s299 + $0x184] sm:$0xf]
        %v401 = vld [vmem:[%s299 + $0x188] sm:$0xff]
        %v402 = vld [vmem:[%s299 + $0x190] sm:$0xff]
        %v403 = vld [vmem:[%s299 + $0x198] sm:$0xff]
        %v404 = vld [vmem:[%s299 + $0x1a0] sm:$0xf]
        %v405 = vld [vmem:[%s299 + $0x1a4] sm:$0xff]
        %v406 = vld [vmem:[%s299 + $0x1ac] sm:$0xff]
        %v407 = vld [vmem:[%s299 + $0x1b4] sm:$0xff]
        %v408 = vld [vmem:[%s299 + $0x1bc] sm:$0xf]
        %v409 = vld [vmem:[%s299 + $0x1c0] sm:$0xff]
        %v410 = vld [vmem:[%s299 + $0x1c8] sm:$0xff]
        %v411 = vld [vmem:[%s299 + $0x1d0] sm:$0xff]
        %v412 = vld [vmem:[%s299 + $0x1d8] sm:$0xf]
        %v413 = vld [vmem:[%s299 + $0x1dc] sm:$0xff]
        %v414 = vld [vmem:[%s299 + $0x1e4] sm:$0xff]
        %v415 = vld [vmem:[%s299 + $0x1ec] sm:$0xff]
        %v416 = vld [vmem:[%s299 + $0x1f4] sm:$0xf]
        %v417 = vld [vmem:[%s299 + $0x1f8] sm:$0xff]
        %v418 = vld [vmem:[%s299 + $0x200] sm:$0xff]
        %v419 = vld [vmem:[%s299 + $0x208] sm:$0xff]
        %v420 = vld [vmem:[%s299 + $0x210] sm:$0xf]
        %v421 = vld [vmem:[%s299 + $0x214] sm:$0xff]
        %v422 = vld [vmem:[%s299 + $0x21c] sm:$0xff]
        %v423 = vld [vmem:[%s299 + $0x224] sm:$0xff]
        %v424 = vld [vmem:[%s299 + $0x22c] sm:$0xf]
        %v425 = vld [vmem:[%s299 + $0x230] sm:$0xff]
        %v426 = vld [vmem:[%s299 + $0x238] sm:$0xff]
        %v427 = vld [vmem:[%s299 + $0x240] sm:$0xff]
        %v428 = vld [vmem:[%s299 + $0x248] sm:$0xf]
        %v429 = vld [vmem:[%s299 + $0x24c] sm:$0xff]
        %v430 = vld [vmem:[%s299 + $0x254] sm:$0xff]
        %v431 = vld [vmem:[%s299 + $0x25c] sm:$0xff]
        %v432 = vld [vmem:[%s299 + $0x264] sm:$0xf]
        %v433 = vld [vmem:[%s299 + $0x268] sm:$0xff]
        %v434 = vld [vmem:[%s299 + $0x270] sm:$0xff]
        %v435 = vld [vmem:[%s299 + $0x278] sm:$0xff]
        %v436 = vld [vmem:[%s299 + $0x280] sm:$0xf]
        %v437 = vld [vmem:[%s299 + $0x284] sm:$0xff]
        %v438 = vld [vmem:[%s299 + $0x28c] sm:$0xff]
        %v439 = vld [vmem:[%s299 + $0x294] sm:$0xff]
        %v440 = vld [vmem:[%s299 + $0x29c] sm:$0xf]
        %v441 = vld [vmem:[%s299 + $0x2a0] sm:$0xff]
        %v442 = vld [vmem:[%s299 + $0x2a8] sm:$0xff]
        %v443 = vld [vmem:[%s299 + $0x2b0] sm:$0xff]
        %v444 = vld [vmem:[%s299 + $0x2b8] sm:$0xf]
        %v445 = vld [vmem:[%s299 + $0x2bc] sm:$0xff]
        %v446 = vld [vmem:[%s299 + $0x2c4] sm:$0xff]
        %v447 = vld [vmem:[%s299 + $0x2cc] sm:$0xff]
        %v448 = vld [vmem:[%s299 + $0x2d4] sm:$0xf]
        %v449 = vld [vmem:[%s299 + $0x2d8] sm:$0xff]
        %v450 = vld [vmem:[%s299 + $0x2e0] sm:$0xff]
        %v451 = vld [vmem:[%s299 + $0x2e8] sm:$0xff]
        %v452 = vld [vmem:[%s299 + $0x2f0] sm:$0xf]
        %v453 = vld [vmem:[%s299 + $0x2f4] sm:$0xff]
        %v454 = vld [vmem:[%s299 + $0x2fc] sm:$0xff]
        %v455 = vld [vmem:[%s299 + $0x304] sm:$0xff]
        %v456 = vld [vmem:[%s299 + $0x30c] sm:$0xf]
        %v457 = vld [vmem:[%s299 + $0x310] sm:$0xff]
        %v458 = vld [vmem:[%s299 + $0x318] sm:$0xff]
        %v459 = vld [vmem:[%s299 + $0x320] sm:$0xff]
        %v460 = vld [vmem:[%s299 + $0x328] sm:$0xf]
        %v461 = vld [vmem:[%s299 + $0x32c] sm:$0xff]
        %v462 = vld [vmem:[%s299 + $0x334] sm:$0xff]
        %v463 = vld [vmem:[%s299 + $0x33c] sm:$0xff]
        %v464 = vld [vmem:[%s299 + $0x344] sm:$0xf]
        %v465 = vld [vmem:[%s299 + $0x348] sm:$0xff]
        %v466 = vld [vmem:[%s299 + $0x350] sm:$0xff]
        %v467 = vld [vmem:[%s299 + $0x358] sm:$0xff]
        %v468 = vld [vmem:[%s299 + $0x360] sm:$0xf]
        %v469 = vld [vmem:[%s299 + $0x364] sm:$0xff]
        %v470 = vld [vmem:[%s299 + $0x36c] sm:$0xff]
        %v471 = vld [vmem:[%s299 + $0x374] sm:$0xff]
        %v472 = vld [vmem:[%s299 + $0x37c] sm:$0xf]
        %v473 = vld [vmem:[#allocation5] sm:$0xf]
        %v474 = vld [vmem:[#allocation5 + $0x4] sm:$0xf]
        %v475 = vld [vmem:[#allocation5 + $0x8] sm:$0xf]
        %v476 = vld [vmem:[#allocation5 + $0xc] sm:$0xf]
        %v477 = vld [vmem:[#allocation5 + $0x10] sm:$0xf]
        %v478 = vld [vmem:[#allocation5 + $0x14] sm:$0xf]
        %v479 = vld [vmem:[#allocation5 + $0x18] sm:$0xf]
        %v480 = vld [vmem:[#allocation5 + $0x1c] sm:$0xf]
        %v481 = vld [vmem:[#allocation5 + $0x20] sm:$0xf]
        %v482 = vld [vmem:[#allocation5 + $0x24] sm:$0xf]
        %v483 = vld [vmem:[#allocation5 + $0x28] sm:$0xf]
        %v484 = vld [vmem:[#allocation5 + $0x2c] sm:$0xf]
        %v485 = vld [vmem:[#allocation5 + $0x30] sm:$0xf]
        %v486 = vld [vmem:[#allocation5 + $0x34] sm:$0xf]
        %v487 = vld [vmem:[#allocation5 + $0x38] sm:$0xf]
        %v488 = vld [vmem:[#allocation5 + $0x3c] sm:$0xf]
        %v489 = vld [vmem:[#allocation5 + $0x40] sm:$0xf]
        %v490 = vld [vmem:[#allocation5 + $0x44] sm:$0xf]
        %v491 = vld [vmem:[#allocation5 + $0x48] sm:$0xf]
        %v492 = vld [vmem:[#allocation5 + $0x4c] sm:$0xf]
        %v493 = vld [vmem:[#allocation5 + $0x50] sm:$0xf]
        %v494 = vld [vmem:[#allocation5 + $0x54] sm:$0xf]
        %v495 = vld [vmem:[#allocation5 + $0x58] sm:$0xf]
        %v496 = vld [vmem:[#allocation5 + $0x5c] sm:$0xf]
        %v497 = vld [vmem:[#allocation5 + $0x60] sm:$0xf]
        %v498 = vld [vmem:[#allocation5 + $0x64] sm:$0xf]
        %v499 = vld [vmem:[#allocation5 + $0x68] sm:$0xf]
        %v500 = vld [vmem:[#allocation5 + $0x6c] sm:$0xf]
        %v501 = vld [vmem:[#allocation5 + $0x70] sm:$0xf]
        %v502 = vld [vmem:[#allocation5 + $0x74] sm:$0xf]
        %v503 = vld [vmem:[#allocation5 + $0x78] sm:$0xf]
        %v504 = vld [vmem:[#allocation5 + $0x7c] sm:$0xf]
        %v505 = vld [vmem:[#allocation5 + $0x80] sm:$0xf]
        %v506 = vld [vmem:[#allocation5 + $0x84] sm:$0xf]
        %v507 = vld [vmem:[#allocation5 + $0x88] sm:$0xf]
        %v508 = vld [vmem:[#allocation5 + $0x8c] sm:$0xf]
        %v509 = vld [vmem:[#allocation5 + $0x90] sm:$0xf]
        %v510 = vld [vmem:[#allocation5 + $0x94] sm:$0xf]
        %v511 = vld [vmem:[#allocation5 + $0x98] sm:$0xf]
        %v512 = vld [vmem:[#allocation5 + $0x9c] sm:$0xf]
        %v513 = vld [vmem:[#allocation5 + $0xa0] sm:$0xf]
        %v514 = vld [vmem:[#allocation5 + $0xa4] sm:$0xf]
        %v515 = vld [vmem:[#allocation5 + $0xa8] sm:$0xf]
        %v516 = vld [vmem:[#allocation5 + $0xac] sm:$0xf]
        %v517 = vld [vmem:[#allocation5 + $0xb0] sm:$0xf]
        %v518 = vld [vmem:[#allocation5 + $0xb4] sm:$0xf]
        %v519 = vld [vmem:[#allocation5 + $0xb8] sm:$0xf]
        %v520 = vld [vmem:[#allocation5 + $0xbc] sm:$0xf]
        %v521 = vld [vmem:[#allocation5 + $0xc0] sm:$0xf]
        %v522 = vld [vmem:[#allocation5 + $0xc4] sm:$0xf]
        %v523 = vld [vmem:[#allocation5 + $0xc8] sm:$0xf]
        %v524 = vld [vmem:[#allocation5 + $0xcc] sm:$0xf]
        %v525 = vld [vmem:[#allocation5 + $0xd0] sm:$0xf]
        %v526 = vld [vmem:[#allocation5 + $0xd4] sm:$0xf]
        %v527 = vld [vmem:[#allocation5 + $0xd8] sm:$0xf]
        %v528 = vld [vmem:[#allocation5 + $0xdc] sm:$0xf]
        %v529 = vld [vmem:[#allocation5 + $0xe0] sm:$0xf]
        %v530 = vld [vmem:[#allocation5 + $0xe4] sm:$0xf]
        %v531 = vld [vmem:[#allocation5 + $0xe8] sm:$0xf]
        %v532 = vld [vmem:[#allocation5 + $0xec] sm:$0xf]
        %v533 = vld [vmem:[#allocation5 + $0xf0] sm:$0xf]
        %v534 = vld [vmem:[#allocation5 + $0xf4] sm:$0xf]
        %v535 = vld [vmem:[#allocation5 + $0xf8] sm:$0xf]
        %v536 = vld [vmem:[#allocation5 + $0xfc] sm:$0xf]
        %v537 = vld [vmem:[#allocation5 + $0x100] sm:$0xf]
        %v538 = vld [vmem:[#allocation5 + $0x104] sm:$0xf]
        %v539 = vld [vmem:[#allocation5 + $0x108] sm:$0xf]
        %v540 = vld [vmem:[#allocation5 + $0x10c] sm:$0xf]
        %v541 = vld [vmem:[#allocation5 + $0x110] sm:$0xf]
        %v542 = vld [vmem:[#allocation5 + $0x114] sm:$0xf]
        %v543 = vld [vmem:[#allocation5 + $0x118] sm:$0xf]
        %v544 = vld [vmem:[#allocation5 + $0x11c] sm:$0xf]
        %v545 = vld [vmem:[#allocation5 + $0x120] sm:$0xf]
        %v546 = vld [vmem:[#allocation5 + $0x124] sm:$0xf]
        %v547 = vld [vmem:[#allocation5 + $0x128] sm:$0xf]
        %v548 = vld [vmem:[#allocation5 + $0x12c] sm:$0xf]
        %v549 = vld [vmem:[#allocation5 + $0x130] sm:$0xf]
        %v550 = vld [vmem:[#allocation5 + $0x134] sm:$0xf]
        %v551 = vld [vmem:[#allocation5 + $0x138] sm:$0xf]
        %v552 = vld [vmem:[#allocation5 + $0x13c] sm:$0xf]
        %v553 = vld [vmem:[#allocation5 + $0x140] sm:$0xf]
        %v554 = vld [vmem:[#allocation5 + $0x144] sm:$0xf]
        %v555 = vld [vmem:[#allocation5 + $0x148] sm:$0xf]
        %v556 = vld [vmem:[#allocation5 + $0x14c] sm:$0xf]
        %v557 = vld [vmem:[#allocation5 + $0x150] sm:$0xf]
        %v558 = vld [vmem:[#allocation5 + $0x154] sm:$0xf]
        %v559 = vld [vmem:[#allocation5 + $0x158] sm:$0xf]
        %v560 = vld [vmem:[#allocation5 + $0x15c] sm:$0xf]
        %v561 = vld [vmem:[#allocation5 + $0x160] sm:$0xf]
        %v562 = vld [vmem:[#allocation5 + $0x164] sm:$0xf]
        %v563 = vld [vmem:[#allocation5 + $0x168] sm:$0xf]
        %v564 = vld [vmem:[#allocation5 + $0x16c] sm:$0xf]
        %v565 = vld [vmem:[#allocation5 + $0x170] sm:$0xf]
        %v566 = vld [vmem:[#allocation5 + $0x174] sm:$0xf]
        %v567 = vld [vmem:[#allocation5 + $0x178] sm:$0xf]
        %v568 = vld [vmem:[#allocation5 + $0x17c] sm:$0xf]
        %v569 = vld [vmem:[#allocation5 + $0x180] sm:$0xf]
        %v570 = vld [vmem:[#allocation5 + $0x184] sm:$0xf]
        %v571 = vld [vmem:[#allocation5 + $0x188] sm:$0xf]
        %v572 = vld [vmem:[#allocation5 + $0x18c] sm:$0xf]
        %v573 = vld [vmem:[#allocation5 + $0x190] sm:$0xf]
        %v574 = vld [vmem:[#allocation5 + $0x194] sm:$0xf]
        %v575 = vld [vmem:[#allocation5 + $0x198] sm:$0xf]
        %v576 = vld [vmem:[#allocation5 + $0x19c] sm:$0xf]
        %v577 = vld [vmem:[#allocation5 + $0x1a0] sm:$0xf]
        %v578 = vld [vmem:[#allocation5 + $0x1a4] sm:$0xf]
        %v579 = vld [vmem:[#allocation5 + $0x1a8] sm:$0xf]
        %v580 = vld [vmem:[#allocation5 + $0x1ac] sm:$0xf]
        %v581 = vld [vmem:[#allocation5 + $0x1b0] sm:$0xf]
        %v582 = vld [vmem:[#allocation5 + $0x1b4] sm:$0xf]
        %v583 = vld [vmem:[#allocation5 + $0x1b8] sm:$0xf]
        %v584 = vld [vmem:[#allocation5 + $0x1bc] sm:$0xf]
        %v585 = vld [vmem:[%s2] sm:$0x1]
        %v587 = vlaneseq
        %v588 = vshrl.u32 %v587, 7
        %v589 = vsub.s32 0, %v588
        %v590 = vrot.slane %v585, %v589
        %v720 = vunpack.c.l.b16 %v345
        %v721 = vunpack.c.h.b16 %v345
        %v722 = vunpack.c.l.b16 %v346
        %v723 = vunpack.c.h.b16 %v346
        %v724 = vunpack.c.l.b16 %v347
        %v725 = vunpack.c.h.b16 %v347
        %v726 = vunpack.c.l.b16 %v348
        %v727 = vunpack.c.l.b16 %v349
        %v728 = vunpack.c.h.b16 %v349
        %v729 = vunpack.c.l.b16 %v350
        %v730 = vunpack.c.h.b16 %v350
        %v731 = vunpack.c.l.b16 %v351
        %v732 = vunpack.c.h.b16 %v351
        %v733 = vunpack.c.l.b16 %v352
        %v734 = vunpack.c.l.b16 %v353
        %v735 = vunpack.c.h.b16 %v353
        %v736 = vunpack.c.l.b16 %v354
        %v737 = vunpack.c.h.b16 %v354
        %v738 = vunpack.c.l.b16 %v355
        %v739 = vunpack.c.h.b16 %v355
        %v740 = vunpack.c.l.b16 %v356
        %v741 = vunpack.c.l.b16 %v357
        %v742 = vunpack.c.h.b16 %v357
        %v743 = vunpack.c.l.b16 %v358
        %v744 = vunpack.c.h.b16 %v358
        %v745 = vunpack.c.l.b16 %v359
        %v746 = vunpack.c.h.b16 %v359
        %v747 = vunpack.c.l.b16 %v360
        %v748 = vunpack.c.l.b16 %v361
        %v749 = vunpack.c.h.b16 %v361
        %v750 = vunpack.c.l.b16 %v362
        %v751 = vunpack.c.h.b16 %v362
        %v752 = vunpack.c.l.b16 %v363
        %v753 = vunpack.c.h.b16 %v363
        %v754 = vunpack.c.l.b16 %v364
        %v755 = vunpack.c.l.b16 %v365
        %v756 = vunpack.c.h.b16 %v365
        %v757 = vunpack.c.l.b16 %v366
        %v758 = vunpack.c.h.b16 %v366
        %v759 = vunpack.c.l.b16 %v367
        %v760 = vunpack.c.h.b16 %v367
        %v761 = vunpack.c.l.b16 %v368
        %v762 = vunpack.c.l.b16 %v369
        %v763 = vunpack.c.h.b16 %v369
        %v764 = vunpack.c.l.b16 %v370
        %v765 = vunpack.c.h.b16 %v370
        %v766 = vunpack.c.l.b16 %v371
        %v767 = vunpack.c.h.b16 %v371
        %v768 = vunpack.c.l.b16 %v372
        %v769 = vunpack.c.l.b16 %v373
        %v770 = vunpack.c.h.b16 %v373
        %v771 = vunpack.c.l.b16 %v374
        %v772 = vunpack.c.h.b16 %v374
        %v773 = vunpack.c.l.b16 %v375
        %v774 = vunpack.c.h.b16 %v375
        %v775 = vunpack.c.l.b16 %v376
        %v776 = vunpack.c.l.b16 %v377
        %v777 = vunpack.c.h.b16 %v377
        %v778 = vunpack.c.l.b16 %v378
        %v779 = vunpack.c.h.b16 %v378
        %v780 = vunpack.c.l.b16 %v379
        %v781 = vunpack.c.h.b16 %v379
        %v782 = vunpack.c.l.b16 %v380
        %v783 = vunpack.c.l.b16 %v381
        %v784 = vunpack.c.h.b16 %v381
        %v785 = vunpack.c.l.b16 %v382
        %v786 = vunpack.c.h.b16 %v382
        %v787 = vunpack.c.l.b16 %v383
        %v788 = vunpack.c.h.b16 %v383
        %v789 = vunpack.c.l.b16 %v384
        %v790 = vunpack.c.l.b16 %v385
        %v791 = vunpack.c.h.b16 %v385
        %v792 = vunpack.c.l.b16 %v386
        %v793 = vunpack.c.h.b16 %v386
        %v794 = vunpack.c.l.b16 %v387
        %v795 = vunpack.c.h.b16 %v387
        %v796 = vunpack.c.l.b16 %v388
        %v797 = vunpack.c.l.b16 %v389
        %v798 = vunpack.c.h.b16 %v389
        %v799 = vunpack.c.l.b16 %v390
        %v800 = vunpack.c.h.b16 %v390
        %v801 = vunpack.c.l.b16 %v391
        %v802 = vunpack.c.h.b16 %v391
        %v803 = vunpack.c.l.b16 %v392
        %v804 = vunpack.c.l.b16 %v393
        %v805 = vunpack.c.h.b16 %v393
        %v806 = vunpack.c.l.b16 %v394
        %v807 = vunpack.c.h.b16 %v394
        %v808 = vunpack.c.l.b16 %v395
        %v809 = vunpack.c.h.b16 %v395
        %v810 = vunpack.c.l.b16 %v396
        %v811 = vunpack.c.l.b16 %v397
        %v812 = vunpack.c.h.b16 %v397
        %v813 = vunpack.c.l.b16 %v398
        %v814 = vunpack.c.h.b16 %v398
        %v815 = vunpack.c.l.b16 %v399
        %v816 = vunpack.c.h.b16 %v399
        %v817 = vunpack.c.l.b16 %v400
        %v818 = vunpack.c.l.b16 %v401
        %v819 = vunpack.c.h.b16 %v401
        %v820 = vunpack.c.l.b16 %v402
        %v821 = vunpack.c.h.b16 %v402
        %v822 = vunpack.c.l.b16 %v403
        %v823 = vunpack.c.h.b16 %v403
        %v824 = vunpack.c.l.b16 %v404
        %v825 = vunpack.c.l.b16 %v405
        %v826 = vunpack.c.h.b16 %v405
        %v827 = vunpack.c.l.b16 %v406
        %v828 = vunpack.c.h.b16 %v406
        %v829 = vunpack.c.l.b16 %v407
        %v830 = vunpack.c.h.b16 %v407
        %v831 = vunpack.c.l.b16 %v408
        %v832 = vunpack.c.l.b16 %v409
        %v833 = vunpack.c.h.b16 %v409
        %v834 = vunpack.c.l.b16 %v410
        %v835 = vunpack.c.h.b16 %v410
        %v836 = vunpack.c.l.b16 %v411
        %v837 = vunpack.c.h.b16 %v411
        %v838 = vunpack.c.l.b16 %v412
        %v839 = vunpack.c.l.b16 %v413
        %v840 = vunpack.c.h.b16 %v413
        %v841 = vunpack.c.l.b16 %v414
        %v842 = vunpack.c.h.b16 %v414
        %v843 = vunpack.c.l.b16 %v415
        %v844 = vunpack.c.h.b16 %v415
        %v845 = vunpack.c.l.b16 %v416
        %v846 = vunpack.c.l.b16 %v417
        %v847 = vunpack.c.h.b16 %v417
        %v848 = vunpack.c.l.b16 %v418
        %v849 = vunpack.c.h.b16 %v418
        %v850 = vunpack.c.l.b16 %v419
        %v851 = vunpack.c.h.b16 %v419
        %v852 = vunpack.c.l.b16 %v420
        %v853 = vunpack.c.l.b16 %v421
        %v854 = vunpack.c.h.b16 %v421
        %v855 = vunpack.c.l.b16 %v422
        %v856 = vunpack.c.h.b16 %v422
        %v857 = vunpack.c.l.b16 %v423
        %v858 = vunpack.c.h.b16 %v423
        %v859 = vunpack.c.l.b16 %v424
        %v860 = vunpack.c.l.b16 %v425
        %v861 = vunpack.c.h.b16 %v425
        %v862 = vunpack.c.l.b16 %v426
        %v863 = vunpack.c.h.b16 %v426
        %v864 = vunpack.c.l.b16 %v427
        %v865 = vunpack.c.h.b16 %v427
        %v866 = vunpack.c.l.b16 %v428
        %v867 = vunpack.c.l.b16 %v429
        %v868 = vunpack.c.h.b16 %v429
        %v869 = vunpack.c.l.b16 %v430
        %v870 = vunpack.c.h.b16 %v430
        %v871 = vunpack.c.l.b16 %v431
        %v872 = vunpack.c.h.b16 %v431
        %v873 = vunpack.c.l.b16 %v432
        %v874 = vunpack.c.l.b16 %v433
        %v875 = vunpack.c.h.b16 %v433
        %v876 = vunpack.c.l.b16 %v434
        %v877 = vunpack.c.h.b16 %v434
        %v878 = vunpack.c.l.b16 %v435
        %v879 = vunpack.c.h.b16 %v435
        %v880 = vunpack.c.l.b16 %v436
        %v881 = vunpack.c.l.b16 %v437
        %v882 = vunpack.c.h.b16 %v437
        %v883 = vunpack.c.l.b16 %v438
        %v884 = vunpack.c.h.b16 %v438
        %v885 = vunpack.c.l.b16 %v439
        %v886 = vunpack.c.h.b16 %v439
        %v887 = vunpack.c.l.b16 %v440
        %v888 = vunpack.c.l.b16 %v441
        %v889 = vunpack.c.h.b16 %v441
        %v890 = vunpack.c.l.b16 %v442
        %v891 = vunpack.c.h.b16 %v442
        %v892 = vunpack.c.l.b16 %v443
        %v893 = vunpack.c.h.b16 %v443
        %v894 = vunpack.c.l.b16 %v444
        %v895 = vunpack.c.l.b16 %v445
        %v896 = vunpack.c.h.b16 %v445
        %v897 = vunpack.c.l.b16 %v446
        %v898 = vunpack.c.h.b16 %v446
        %v899 = vunpack.c.l.b16 %v447
        %v900 = vunpack.c.h.b16 %v447
        %v901 = vunpack.c.l.b16 %v448
        %v902 = vunpack.c.l.b16 %v449
        %v903 = vunpack.c.h.b16 %v449
        %v904 = vunpack.c.l.b16 %v450
        %v905 = vunpack.c.h.b16 %v450
        %v906 = vunpack.c.l.b16 %v451
        %v907 = vunpack.c.h.b16 %v451
        %v908 = vunpack.c.l.b16 %v452
        %v909 = vunpack.c.l.b16 %v453
        %v910 = vunpack.c.h.b16 %v453
        %v911 = vunpack.c.l.b16 %v454
        %v912 = vunpack.c.h.b16 %v454
        %v913 = vunpack.c.l.b16 %v455
        %v914 = vunpack.c.h.b16 %v455
        %v915 = vunpack.c.l.b16 %v456
        %v916 = vunpack.c.l.b16 %v457
        %v917 = vunpack.c.h.b16 %v457
        %v918 = vunpack.c.l.b16 %v458
        %v919 = vunpack.c.h.b16 %v458
        %v920 = vunpack.c.l.b16 %v459
        %v921 = vunpack.c.h.b16 %v459
        %v922 = vunpack.c.l.b16 %v460
        %v923 = vunpack.c.l.b16 %v461
        %v924 = vunpack.c.h.b16 %v461
        %v925 = vunpack.c.l.b16 %v462
        %v926 = vunpack.c.h.b16 %v462
        %v927 = vunpack.c.l.b16 %v463
        %v928 = vunpack.c.h.b16 %v463
        %v929 = vunpack.c.l.b16 %v464
        %v930 = vunpack.c.l.b16 %v465
        %v931 = vunpack.c.h.b16 %v465
        %v932 = vunpack.c.l.b16 %v466
        %v933 = vunpack.c.h.b16 %v466
        %v934 = vunpack.c.l.b16 %v467
        %v935 = vunpack.c.h.b16 %v467
        %v936 = vunpack.c.l.b16 %v468
        %v937 = vunpack.c.l.b16 %v469
        %v938 = vunpack.c.h.b16 %v469
        %v939 = vunpack.c.l.b16 %v470
        %v940 = vunpack.c.h.b16 %v470
        %v941 = vunpack.c.l.b16 %v471
        %v942 = vunpack.c.h.b16 %v471
        %v943 = vunpack.c.l.b16 %v472
        %v944 = vpack.c.b16 %v727, %v720
        %v945 = vpack.c.b16 %v728, %v721
        %v946 = vpack.c.b16 %v729, %v722
        %v947 = vpack.c.b16 %v730, %v723
        %v948 = vpack.c.b16 %v731, %v724
        %v949 = vpack.c.b16 %v732, %v725
        %v950 = vpack.c.b16 %v733, %v726
        %v951 = vpack.c.b16 %v741, %v734
        %v952 = vpack.c.b16 %v742, %v735
        %v953 = vpack.c.b16 %v743, %v736
        %v954 = vpack.c.b16 %v744, %v737
        %v955 = vpack.c.b16 %v745, %v738
        %v956 = vpack.c.b16 %v746, %v739
        %v957 = vpack.c.b16 %v747, %v740
        %v958 = vpack.c.b16 %v755, %v748
        %v959 = vpack.c.b16 %v756, %v749
        %v960 = vpack.c.b16 %v757, %v750
        %v961 = vpack.c.b16 %v758, %v751
        %v962 = vpack.c.b16 %v759, %v752
        %v963 = vpack.c.b16 %v760, %v753
        %v964 = vpack.c.b16 %v761, %v754
        %v965 = vpack.c.b16 %v769, %v762
        %v966 = vpack.c.b16 %v770, %v763
        %v967 = vpack.c.b16 %v771, %v764
        %v968 = vpack.c.b16 %v772, %v765
        %v969 = vpack.c.b16 %v773, %v766
        %v970 = vpack.c.b16 %v774, %v767
        %v971 = vpack.c.b16 %v775, %v768
        %v972 = vpack.c.b16 %v783, %v776
        %v973 = vpack.c.b16 %v784, %v777
        %v974 = vpack.c.b16 %v785, %v778
        %v975 = vpack.c.b16 %v786, %v779
        %v976 = vpack.c.b16 %v787, %v780
        %v977 = vpack.c.b16 %v788, %v781
        %v978 = vpack.c.b16 %v789, %v782
        %v979 = vpack.c.b16 %v797, %v790
        %v980 = vpack.c.b16 %v798, %v791
        %v981 = vpack.c.b16 %v799, %v792
        %v982 = vpack.c.b16 %v800, %v793
        %v983 = vpack.c.b16 %v801, %v794
        %v984 = vpack.c.b16 %v802, %v795
        %v985 = vpack.c.b16 %v803, %v796
        %v986 = vpack.c.b16 %v811, %v804
        %v987 = vpack.c.b16 %v812, %v805
        %v988 = vpack.c.b16 %v813, %v806
        %v989 = vpack.c.b16 %v814, %v807
        %v990 = vpack.c.b16 %v815, %v808
        %v991 = vpack.c.b16 %v816, %v809
        %v992 = vpack.c.b16 %v817, %v810
        %v993 = vpack.c.b16 %v825, %v818
        %v994 = vpack.c.b16 %v826, %v819
        %v995 = vpack.c.b16 %v827, %v820
        %v996 = vpack.c.b16 %v828, %v821
        %v997 = vpack.c.b16 %v829, %v822
        %v998 = vpack.c.b16 %v830, %v823
        %v999 = vpack.c.b16 %v831, %v824
        %v1000 = vpack.c.b16 %v839, %v832
        %v1001 = vpack.c.b16 %v840, %v833
        %v1002 = vpack.c.b16 %v841, %v834
        %v1003 = vpack.c.b16 %v842, %v835
        %v1004 = vpack.c.b16 %v843, %v836
        %v1005 = vpack.c.b16 %v844, %v837
        %v1006 = vpack.c.b16 %v845, %v838
        %v1007 = vpack.c.b16 %v853, %v846
        %v1008 = vpack.c.b16 %v854, %v847
        %v1009 = vpack.c.b16 %v855, %v848
        %v1010 = vpack.c.b16 %v856, %v849
        %v1011 = vpack.c.b16 %v857, %v850
        %v1012 = vpack.c.b16 %v858, %v851
        %v1013 = vpack.c.b16 %v859, %v852
        %v1014 = vpack.c.b16 %v867, %v860
        %v1015 = vpack.c.b16 %v868, %v861
        %v1016 = vpack.c.b16 %v869, %v862
        %v1017 = vpack.c.b16 %v870, %v863
        %v1018 = vpack.c.b16 %v871, %v864
        %v1019 = vpack.c.b16 %v872, %v865
        %v1020 = vpack.c.b16 %v873, %v866
        %v1021 = vpack.c.b16 %v881, %v874
        %v1022 = vpack.c.b16 %v882, %v875
        %v1023 = vpack.c.b16 %v883, %v876
        %v1024 = vpack.c.b16 %v884, %v877
        %v1025 = vpack.c.b16 %v885, %v878
        %v1026 = vpack.c.b16 %v886, %v879
        %v1027 = vpack.c.b16 %v887, %v880
        %v1028 = vpack.c.b16 %v895, %v888
        %v1029 = vpack.c.b16 %v896, %v889
        %v1030 = vpack.c.b16 %v897, %v890
        %v1031 = vpack.c.b16 %v898, %v891
        %v1032 = vpack.c.b16 %v899, %v892
        %v1033 = vpack.c.b16 %v900, %v893
        %v1034 = vpack.c.b16 %v901, %v894
        %v1035 = vpack.c.b16 %v909, %v902
        %v1036 = vpack.c.b16 %v910, %v903
        %v1037 = vpack.c.b16 %v911, %v904
        %v1038 = vpack.c.b16 %v912, %v905
        %v1039 = vpack.c.b16 %v913, %v906
        %v1040 = vpack.c.b16 %v914, %v907
        %v1041 = vpack.c.b16 %v915, %v908
        %v1042 = vpack.c.b16 %v923, %v916
        %v1043 = vpack.c.b16 %v924, %v917
        %v1044 = vpack.c.b16 %v925, %v918
        %v1045 = vpack.c.b16 %v926, %v919
        %v1046 = vpack.c.b16 %v927, %v920
        %v1047 = vpack.c.b16 %v928, %v921
        %v1048 = vpack.c.b16 %v929, %v922
        %v1049 = vpack.c.b16 %v937, %v930
        %v1050 = vpack.c.b16 %v938, %v931
        %v1051 = vpack.c.b16 %v939, %v932
        %v1052 = vpack.c.b16 %v940, %v933
        %v1053 = vpack.c.b16 %v941, %v934
        %v1054 = vpack.c.b16 %v942, %v935
        %v1055 = vpack.c.b16 %v943, %v936
        %v1280 = vunpack.c.l.b16 %v473
        %v1281 = vunpack.c.l.b16 %v474
        %v1282 = vunpack.c.l.b16 %v475
        %v1283 = vunpack.c.l.b16 %v476
        %v1284 = vunpack.c.l.b16 %v477
        %v1285 = vunpack.c.l.b16 %v478
        %v1286 = vunpack.c.l.b16 %v479
        %v1287 = vunpack.c.l.b16 %v480
        %v1288 = vunpack.c.l.b16 %v481
        %v1289 = vunpack.c.l.b16 %v482
        %v1290 = vunpack.c.l.b16 %v483
        %v1291 = vunpack.c.l.b16 %v484
        %v1292 = vunpack.c.l.b16 %v485
        %v1293 = vunpack.c.l.b16 %v486
        %v1294 = vunpack.c.l.b16 %v487
        %v1295 = vunpack.c.l.b16 %v488
        %v1296 = vunpack.c.l.b16 %v489
        %v1297 = vunpack.c.l.b16 %v490
        %v1298 = vunpack.c.l.b16 %v491
        %v1299 = vunpack.c.l.b16 %v492
        %v1300 = vunpack.c.l.b16 %v493
        %v1301 = vunpack.c.l.b16 %v494
        %v1302 = vunpack.c.l.b16 %v495
        %v1303 = vunpack.c.l.b16 %v496
        %v1304 = vunpack.c.l.b16 %v497
        %v1305 = vunpack.c.l.b16 %v498
        %v1306 = vunpack.c.l.b16 %v499
        %v1307 = vunpack.c.l.b16 %v500
        %v1308 = vunpack.c.l.b16 %v501
        %v1309 = vunpack.c.l.b16 %v502
        %v1310 = vunpack.c.l.b16 %v503
        %v1311 = vunpack.c.l.b16 %v504
        %v1312 = vunpack.c.l.b16 %v505
        %v1313 = vunpack.c.l.b16 %v506
        %v1314 = vunpack.c.l.b16 %v507
        %v1315 = vunpack.c.l.b16 %v508
        %v1316 = vunpack.c.l.b16 %v509
        %v1317 = vunpack.c.l.b16 %v510
        %v1318 = vunpack.c.l.b16 %v511
        %v1319 = vunpack.c.l.b16 %v512
        %v1320 = vunpack.c.l.b16 %v513
        %v1321 = vunpack.c.l.b16 %v514
        %v1322 = vunpack.c.l.b16 %v515
        %v1323 = vunpack.c.l.b16 %v516
        %v1324 = vunpack.c.l.b16 %v517
        %v1325 = vunpack.c.l.b16 %v518
        %v1326 = vunpack.c.l.b16 %v519
        %v1327 = vunpack.c.l.b16 %v520
        %v1328 = vunpack.c.l.b16 %v521
        %v1329 = vunpack.c.l.b16 %v522
        %v1330 = vunpack.c.l.b16 %v523
        %v1331 = vunpack.c.l.b16 %v524
        %v1332 = vunpack.c.l.b16 %v525
        %v1333 = vunpack.c.l.b16 %v526
        %v1334 = vunpack.c.l.b16 %v527
        %v1335 = vunpack.c.l.b16 %v528
        %v1336 = vunpack.c.l.b16 %v529
        %v1337 = vunpack.c.l.b16 %v530
        %v1338 = vunpack.c.l.b16 %v531
        %v1339 = vunpack.c.l.b16 %v532
        %v1340 = vunpack.c.l.b16 %v533
        %v1341 = vunpack.c.l.b16 %v534
        %v1342 = vunpack.c.l.b16 %v535
        %v1343 = vunpack.c.l.b16 %v536
        %v1344 = vunpack.c.l.b16 %v537
        %v1345 = vunpack.c.l.b16 %v538
        %v1346 = vunpack.c.l.b16 %v539
        %v1347 = vunpack.c.l.b16 %v540
        %v1348 = vunpack.c.l.b16 %v541
        %v1349 = vunpack.c.l.b16 %v542
        %v1350 = vunpack.c.l.b16 %v543
        %v1351 = vunpack.c.l.b16 %v544
        %v1352 = vunpack.c.l.b16 %v545
        %v1353 = vunpack.c.l.b16 %v546
        %v1354 = vunpack.c.l.b16 %v547
        %v1355 = vunpack.c.l.b16 %v548
        %v1356 = vunpack.c.l.b16 %v549
        %v1357 = vunpack.c.l.b16 %v550
        %v1358 = vunpack.c.l.b16 %v551
        %v1359 = vunpack.c.l.b16 %v552
        %v1360 = vunpack.c.l.b16 %v553
        %v1361 = vunpack.c.l.b16 %v554
        %v1362 = vunpack.c.l.b16 %v555
        %v1363 = vunpack.c.l.b16 %v556
        %v1364 = vunpack.c.l.b16 %v557
        %v1365 = vunpack.c.l.b16 %v558
        %v1366 = vunpack.c.l.b16 %v559
        %v1367 = vunpack.c.l.b16 %v560
        %v1368 = vunpack.c.l.b16 %v561
        %v1369 = vunpack.c.l.b16 %v562
        %v1370 = vunpack.c.l.b16 %v563
        %v1371 = vunpack.c.l.b16 %v564
        %v1372 = vunpack.c.l.b16 %v565
        %v1373 = vunpack.c.l.b16 %v566
        %v1374 = vunpack.c.l.b16 %v567
        %v1375 = vunpack.c.l.b16 %v568
        %v1376 = vunpack.c.l.b16 %v569
        %v1377 = vunpack.c.l.b16 %v570
        %v1378 = vunpack.c.l.b16 %v571
        %v1379 = vunpack.c.l.b16 %v572
        %v1380 = vunpack.c.l.b16 %v573
        %v1381 = vunpack.c.l.b16 %v574
        %v1382 = vunpack.c.l.b16 %v575
        %v1383 = vunpack.c.l.b16 %v576
        %v1384 = vunpack.c.l.b16 %v577
        %v1385 = vunpack.c.l.b16 %v578
        %v1386 = vunpack.c.l.b16 %v579
        %v1387 = vunpack.c.l.b16 %v580
        %v1388 = vunpack.c.l.b16 %v581
        %v1389 = vunpack.c.l.b16 %v582
        %v1390 = vunpack.c.l.b16 %v583
        %v1391 = vunpack.c.l.b16 %v584
        %v1392 = vpack.c.b16 %v1281, %v1280
        %v1393 = vpack.c.b16 %v1283, %v1282
        %v1394 = vpack.c.b16 %v1285, %v1284
        %v1395 = vpack.c.b16 %v1287, %v1286
        %v1396 = vpack.c.b16 %v1289, %v1288
        %v1397 = vpack.c.b16 %v1291, %v1290
        %v1398 = vpack.c.b16 %v1293, %v1292
        %v1399 = vpack.c.b16 %v1295, %v1294
        %v1400 = vpack.c.b16 %v1297, %v1296
        %v1401 = vpack.c.b16 %v1299, %v1298
        %v1402 = vpack.c.b16 %v1301, %v1300
        %v1403 = vpack.c.b16 %v1303, %v1302
        %v1404 = vpack.c.b16 %v1305, %v1304
        %v1405 = vpack.c.b16 %v1307, %v1306
        %v1406 = vpack.c.b16 %v1309, %v1308
        %v1407 = vpack.c.b16 %v1311, %v1310
        %v1408 = vpack.c.b16 %v1313, %v1312
        %v1409 = vpack.c.b16 %v1315, %v1314
        %v1410 = vpack.c.b16 %v1317, %v1316
        %v1411 = vpack.c.b16 %v1319, %v1318
        %v1412 = vpack.c.b16 %v1321, %v1320
        %v1413 = vpack.c.b16 %v1323, %v1322
        %v1414 = vpack.c.b16 %v1325, %v1324
        %v1415 = vpack.c.b16 %v1327, %v1326
        %v1416 = vpack.c.b16 %v1329, %v1328
        %v1417 = vpack.c.b16 %v1331, %v1330
        %v1418 = vpack.c.b16 %v1333, %v1332
        %v1419 = vpack.c.b16 %v1335, %v1334
        %v1420 = vpack.c.b16 %v1337, %v1336
        %v1421 = vpack.c.b16 %v1339, %v1338
        %v1422 = vpack.c.b16 %v1341, %v1340
        %v1423 = vpack.c.b16 %v1343, %v1342
        %v1424 = vpack.c.b16 %v1345, %v1344
        %v1425 = vpack.c.b16 %v1347, %v1346
        %v1426 = vpack.c.b16 %v1349, %v1348
        %v1427 = vpack.c.b16 %v1351, %v1350
        %v1428 = vpack.c.b16 %v1353, %v1352
        %v1429 = vpack.c.b16 %v1355, %v1354
        %v1430 = vpack.c.b16 %v1357, %v1356
        %v1431 = vpack.c.b16 %v1359, %v1358
        %v1432 = vpack.c.b16 %v1361, %v1360
        %v1433 = vpack.c.b16 %v1363, %v1362
        %v1434 = vpack.c.b16 %v1365, %v1364
        %v1435 = vpack.c.b16 %v1367, %v1366
        %v1436 = vpack.c.b16 %v1369, %v1368
        %v1437 = vpack.c.b16 %v1371, %v1370
        %v1438 = vpack.c.b16 %v1373, %v1372
        %v1439 = vpack.c.b16 %v1375, %v1374
        %v1440 = vpack.c.b16 %v1377, %v1376
        %v1441 = vpack.c.b16 %v1379, %v1378
        %v1442 = vpack.c.b16 %v1381, %v1380
        %v1443 = vpack.c.b16 %v1383, %v1382
        %v1444 = vpack.c.b16 %v1385, %v1384
        %v1445 = vpack.c.b16 %v1387, %v1386
        %v1446 = vpack.c.b16 %v1389, %v1388
        %v1447 = vpack.c.b16 %v1391, %v1390
        %1504 = vmatprep.subr.bf16.mxu0 0
        %1505 = vmatpush1.bf16.msra.mxu0 %v1392
        %1506 = vmatprep.subr.bf16.mxu0 0
        %1507 = vmatpush1.bf16.msra.mxu0 %v1393
        %1508 = vmatprep.subr.bf16.mxu0 0
        %1509 = vmatpush1.bf16.msra.mxu0 %v1394
        %1510 = vmatprep.subr.bf16.mxu0 0
        %1511 = vmatpush1.bf16.msra.mxu0 %v1395
        %1512 = vmatprep.subr.bf16.mxu0 0
        %1513 = vmatpush1.bf16.msra.mxu0 %v1396
        %1514 = vmatprep.subr.bf16.mxu0 0
        %1515 = vmatpush1.bf16.msra.mxu0 %v1397
        %1516 = vmatprep.subr.bf16.mxu0 0
        %1517 = vmatpush1.bf16.msra.mxu0 %v1398
        %1518 = vmatprep.subr.bf16.mxu0 0
        %1519 = vmatpush1.bf16.msra.mxu0 %v1399
        %1520 = vmatprep.subr.bf16.mxu0 0
        %1521 = vmatpush1.bf16.msra.mxu0 %v1400
        %1522 = vmatprep.subr.bf16.mxu0 0
        %1523 = vmatpush1.bf16.msra.mxu0 %v1401
        %1524 = vmatprep.subr.bf16.mxu0 0
        %1525 = vmatpush1.bf16.msra.mxu0 %v1402
        %1526 = vmatprep.subr.bf16.mxu0 0
        %1527 = vmatpush1.bf16.msra.mxu0 %v1403
        %1528 = vmatprep.subr.bf16.mxu0 0
        %1529 = vmatpush1.bf16.msra.mxu0 %v1404
        %1530 = vmatprep.subr.bf16.mxu0 0
        %1531 = vmatpush1.bf16.msra.mxu0 %v1405
        %1532 = vmatprep.subr.bf16.mxu0 0
        %1533 = vmatpush1.bf16.msra.mxu0 %v1406
        %1534 = vmatprep.subr.bf16.mxu0 0
        %1535 = vmatpush1.bf16.msra.mxu0 %v1407
        %1536 = vmatprep.mubr.bf16.mxu0 %v945
        %1537 = vmatmul.mubr.bf16.gmra.mrb[0].mxu0 %v944
        %v1538 = vpop.f32.mrb[0].mxu0
        %v1539 = vadd.f32 %v590, %v1538
        %v1540 = vpop.f32.mrb[0].mxu0
        %v1541 = vpop.f32.mrb[0].mxu0
        %v1542 = vadd.f32 %v590, %v1541
        %v1543 = vpop.f32.mrb[0].mxu0
        %1544 = vmatprep.mubr.bf16.mxu0 %v952
        %1545 = vmatmul.mubr.bf16.gmra.mrb[0].mxu0 %v951
        %v1546 = vpop.f32.mrb[0].mxu0
        %v1547 = vadd.f32 %v590, %v1546
        %v1548 = vpop.f32.mrb[0].mxu0
        %v1549 = vpop.f32.mrb[0].mxu0
        %v1550 = vadd.f32 %v590, %v1549
        %v1551 = vpop.f32.mrb[0].mxu0
        %1552 = vmatprep.mubr.bf16.mxu0 %v959
        %1553 = vmatmul.mubr.bf16.gmra.mrb[0].mxu0 %v958
        %v1554 = vpop.f32.mrb[0].mxu0
        %v1555 = vadd.f32 %v590, %v1554
        %v1556 = vpop.f32.mrb[0].mxu0
        %v1557 = vpop.f32.mrb[0].mxu0
        %v1558 = vadd.f32 %v590, %v1557
        %v1559 = vpop.f32.mrb[0].mxu0
        %1560 = vmatprep.mubr.bf16.mxu0 %v966
        %1561 = vmatmul.mubr.bf16.gmra.mrb[0].mxu0 %v965
        %v1562 = vpop.f32.mrb[0].mxu0
        %v1563 = vadd.f32 %v590, %v1562
        %v1564 = vpop.f32.mrb[0].mxu0
        %v1565 = vpop.f32.mrb[0].mxu0
        %v1566 = vadd.f32 %v590, %v1565
        %v1567 = vpop.f32.mrb[0].mxu0
        %1568 = vmatprep.mubr.bf16.mxu0 %v973
        %1569 = vmatmul.mubr.bf16.gmra.mrb[0].mxu0 %v972
        %v1570 = vpop.f32.mrb[0].mxu0
        %v1571 = vadd.f32 %v590, %v1570
        %v1572 = vpop.f32.mrb[0].mxu0
        %v1573 = vpop.f32.mrb[0].mxu0
        %v1574 = vadd.f32 %v590, %v1573
        %v1575 = vpop.f32.mrb[0].mxu0
        %1576 = vmatprep.mubr.bf16.mxu0 %v980
        %1577 = vmatmul.mubr.bf16.gmra.mrb[0].mxu0 %v979
        %v1578 = vpop.f32.mrb[0].mxu0
        %v1579 = vadd.f32 %v590, %v1578
        %v1580 = vpop.f32.mrb[0].mxu0
        %v1581 = vpop.f32.mrb[0].mxu0
        %v1582 = vadd.f32 %v590, %v1581
        %v1583 = vpop.f32.mrb[0].mxu0
        %1584 = vmatprep.mubr.bf16.mxu0 %v987
        %1585 = vmatmul.mubr.bf16.gmra.mrb[0].mxu0 %v986
        %v1586 = vpop.f32.mrb[0].mxu0
        %v1587 = vadd.f32 %v590, %v1586
        %v1588 = vpop.f32.mrb[0].mxu0
        %v1589 = vpop.f32.mrb[0].mxu0
        %v1590 = vadd.f32 %v590, %v1589
        %v1591 = vpop.f32.mrb[0].mxu0
        %1592 = vmatprep.mubr.bf16.mxu0 %v994
        %1593 = vmatmul.mubr.bf16.gmra.mrb[0].mxu0 %v993
        %v1594 = vpop.f32.mrb[0].mxu0
        %v1595 = vadd.f32 %v590, %v1594
        %v1596 = vpop.f32.mrb[0].mxu0
        %v1597 = vpop.f32.mrb[0].mxu0
        %v1598 = vadd.f32 %v590, %v1597
        %v1599 = vpop.f32.mrb[0].mxu0
        %1600 = vmatprep.mubr.bf16.mxu0 %v1001
        %1601 = vmatmul.mubr.bf16.gmra.mrb[0].mxu0 %v1000
        %v1602 = vpop.f32.mrb[0].mxu0
        %v1603 = vadd.f32 %v590, %v1602
        %v1604 = vpop.f32.mrb[0].mxu0
        %v1605 = vpop.f32.mrb[0].mxu0
        %v1606 = vadd.f32 %v590, %v1605
        %v1607 = vpop.f32.mrb[0].mxu0
        %1608 = vmatprep.mubr.bf16.mxu0 %v1008
        %1609 = vmatmul.mubr.bf16.gmra.mrb[0].mxu0 %v1007
        %v1610 = vpop.f32.mrb[0].mxu0
        %v1611 = vadd.f32 %v590, %v1610
        %v1612 = vpop.f32.mrb[0].mxu0
        %v1613 = vpop.f32.mrb[0].mxu0
        %v1614 = vadd.f32 %v590, %v1613
        %v1615 = vpop.f32.mrb[0].mxu0
        %1616 = vmatprep.mubr.bf16.mxu0 %v1015
        %1617 = vmatmul.mubr.bf16.gmra.mrb[0].mxu0 %v1014
        %v1618 = vpop.f32.mrb[0].mxu0
        %v1619 = vadd.f32 %v590, %v1618
        %v1620 = vpop.f32.mrb[0].mxu0
        %v1621 = vpop.f32.mrb[0].mxu0
        %v1622 = vadd.f32 %v590, %v1621
        %v1623 = vpop.f32.mrb[0].mxu0
        %1624 = vmatprep.mubr.bf16.mxu0 %v1022
        %1625 = vmatmul.mubr.bf16.gmra.mrb[0].mxu0 %v1021
        %v1626 = vpop.f32.mrb[0].mxu0
        %v1627 = vadd.f32 %v590, %v1626
        %v1628 = vpop.f32.mrb[0].mxu0
        %v1629 = vpop.f32.mrb[0].mxu0
        %v1630 = vadd.f32 %v590, %v1629
        %v1631 = vpop.f32.mrb[0].mxu0
        %1632 = vmatprep.mubr.bf16.mxu0 %v1029
        %1633 = vmatmul.mubr.bf16.gmra.mrb[0].mxu0 %v1028
        %v1634 = vpop.f32.mrb[0].mxu0
        %v1635 = vadd.f32 %v590, %v1634
        %v1636 = vpop.f32.mrb[0].mxu0
        %v1637 = vpop.f32.mrb[0].mxu0
        %v1638 = vadd.f32 %v590, %v1637
        %v1639 = vpop.f32.mrb[0].mxu0
        %1640 = vmatprep.mubr.bf16.mxu0 %v1036
        %1641 = vmatmul.mubr.bf16.gmra.mrb[0].mxu0 %v1035
        %v1642 = vpop.f32.mrb[0].mxu0
        %v1643 = vadd.f32 %v590, %v1642
        %v1644 = vpop.f32.mrb[0].mxu0
        %v1645 = vpop.f32.mrb[0].mxu0
        %v1646 = vadd.f32 %v590, %v1645
        %v1647 = vpop.f32.mrb[0].mxu0
        %1648 = vmatprep.mubr.bf16.mxu0 %v1043
        %1649 = vmatmul.mubr.bf16.gmra.mrb[0].mxu0 %v1042
        %v1650 = vpop.f32.mrb[0].mxu0
        %v1651 = vadd.f32 %v590, %v1650
        %v1652 = vpop.f32.mrb[0].mxu0
        %v1653 = vpop.f32.mrb[0].mxu0
        %v1654 = vadd.f32 %v590, %v1653
        %v1655 = vpop.f32.mrb[0].mxu0
        %1656 = vmatprep.mubr.bf16.mxu0 %v1050
        %1657 = vmatmul.mubr.bf16.gmra.mrb[0].mxu0 %v1049
        %v1658 = vpop.f32.mrb[0].mxu0
        %v1659 = vadd.f32 %v590, %v1658
        %v1660 = vpop.f32.mrb[0].mxu0
        %v1661 = vpop.f32.mrb[0].mxu0
        %v1662 = vadd.f32 %v590, %v1661
        %v1663 = vpop.f32.mrb[0].mxu0
        %1664 = vdwg.mxu0
        %1665 = vmatprep.subr.bf16.mxu0 0
        %1666 = vmatpush1.bf16.msra.mxu0 %v1408
        %1667 = vmatprep.subr.bf16.mxu0 0
        %1668 = vmatpush1.bf16.msra.mxu0 %v1409
        %1669 = vmatprep.subr.bf16.mxu0 0
        %1670 = vmatpush1.bf16.msra.mxu0 %v1410
        %1671 = vmatprep.subr.bf16.mxu0 0
        %1672 = vmatpush1.bf16.msra.mxu0 %v1411
        %1673 = vmatprep.subr.bf16.mxu0 0
        %1674 = vmatpush1.bf16.msra.mxu0 %v1412
        %1675 = vmatprep.subr.bf16.mxu0 0
        %1676 = vmatpush1.bf16.msra.mxu0 %v1413
        %1677 = vmatprep.subr.bf16.mxu0 0
        %1678 = vmatpush1.bf16.msra.mxu0 %v1414
        %1679 = vmatprep.subr.bf16.mxu0 0
        %1680 = vmatpush1.bf16.msra.mxu0 %v1415
        %1681 = vmatprep.subr.bf16.mxu0 0
        %1682 = vmatpush1.bf16.msra.mxu0 %v1416
        %1683 = vmatprep.subr.bf16.mxu0 0
        %1684 = vmatpush1.bf16.msra.mxu0 %v1417
        %1685 = vmatprep.subr.bf16.mxu0 0
        %1686 = vmatpush1.bf16.msra.mxu0 %v1418
        %1687 = vmatprep.subr.bf16.mxu0 0
        %1688 = vmatpush1.bf16.msra.mxu0 %v1419
        %1689 = vmatprep.subr.bf16.mxu0 0
        %1690 = vmatpush1.bf16.msra.mxu0 %v1420
        %1691 = vmatprep.subr.bf16.mxu0 0
        %1692 = vmatpush1.bf16.msra.mxu0 %v1421
        %1693 = vmatprep.subr.bf16.mxu0 0
        %1694 = vmatpush1.bf16.msra.mxu0 %v1422
        %1695 = vmatprep.subr.bf16.mxu0 0
        %1696 = vmatpush1.bf16.msra.mxu0 %v1423
        %1697 = vmatprep.mubr.bf16.mxu0 %v947
        %1698 = vmatmul.mubr.bf16.gmra.mrb[0].mxu0 %v946
        %v1699 = vpop.f32.mrb[0].mxu0
        %v1700 = vadd.f32 %v1539, %v1699
        %v1701 = vpop.f32.mrb[0].mxu0
        %v1702 = vpop.f32.mrb[0].mxu0
        %v1703 = vadd.f32 %v1542, %v1702
        %v1704 = vpop.f32.mrb[0].mxu0
        %1705 = vmatprep.mubr.bf16.mxu0 %v954
        %1706 = vmatmul.mubr.bf16.gmra.mrb[0].mxu0 %v953
        %v1707 = vpop.f32.mrb[0].mxu0
        %v1708 = vadd.f32 %v1547, %v1707
        %v1709 = vpop.f32.mrb[0].mxu0
        %v1710 = vpop.f32.mrb[0].mxu0
        %v1711 = vadd.f32 %v1550, %v1710
        %v1712 = vpop.f32.mrb[0].mxu0
        %1713 = vmatprep.mubr.bf16.mxu0 %v961
        %1714 = vmatmul.mubr.bf16.gmra.mrb[0].mxu0 %v960
        %v1715 = vpop.f32.mrb[0].mxu0
        %v1716 = vadd.f32 %v1555, %v1715
        %v1717 = vpop.f32.mrb[0].mxu0
        %v1718 = vpop.f32.mrb[0].mxu0
        %v1719 = vadd.f32 %v1558, %v1718
        %v1720 = vpop.f32.mrb[0].mxu0
        %1721 = vmatprep.mubr.bf16.mxu0 %v968
        %1722 = vmatmul.mubr.bf16.gmra.mrb[0].mxu0 %v967
        %v1723 = vpop.f32.mrb[0].mxu0
        %v1724 = vadd.f32 %v1563, %v1723
        %v1725 = vpop.f32.mrb[0].mxu0
        %v1726 = vpop.f32.mrb[0].mxu0
        %v1727 = vadd.f32 %v1566, %v1726
        %v1728 = vpop.f32.mrb[0].mxu0
        %1729 = vmatprep.mubr.bf16.mxu0 %v975
        %1730 = vmatmul.mubr.bf16.gmra.mrb[0].mxu0 %v974
        %v1731 = vpop.f32.mrb[0].mxu0
        %v1732 = vadd.f32 %v1571, %v1731
        %v1733 = vpop.f32.mrb[0].mxu0
        %v1734 = vpop.f32.mrb[0].mxu0
        %v1735 = vadd.f32 %v1574, %v1734
        %v1736 = vpop.f32.mrb[0].mxu0
        %1737 = vmatprep.mubr.bf16.mxu0 %v982
        %1738 = vmatmul.mubr.bf16.gmra.mrb[0].mxu0 %v981
        %v1739 = vpop.f32.mrb[0].mxu0
        %v1740 = vadd.f32 %v1579, %v1739
        %v1741 = vpop.f32.mrb[0].mxu0
        %v1742 = vpop.f32.mrb[0].mxu0
        %v1743 = vadd.f32 %v1582, %v1742
        %v1744 = vpop.f32.mrb[0].mxu0
        %1745 = vmatprep.mubr.bf16.mxu0 %v989
        %1746 = vmatmul.mubr.bf16.gmra.mrb[0].mxu0 %v988
        %v1747 = vpop.f32.mrb[0].mxu0
        %v1748 = vadd.f32 %v1587, %v1747
        %v1749 = vpop.f32.mrb[0].mxu0
        %v1750 = vpop.f32.mrb[0].mxu0
        %v1751 = vadd.f32 %v1590, %v1750
        %v1752 = vpop.f32.mrb[0].mxu0
        %1753 = vmatprep.mubr.bf16.mxu0 %v996
        %1754 = vmatmul.mubr.bf16.gmra.mrb[0].mxu0 %v995
        %v1755 = vpop.f32.mrb[0].mxu0
        %v1756 = vadd.f32 %v1595, %v1755
        %v1757 = vpop.f32.mrb[0].mxu0
        %v1758 = vpop.f32.mrb[0].mxu0
        %v1759 = vadd.f32 %v1598, %v1758
        %v1760 = vpop.f32.mrb[0].mxu0
        %1761 = vmatprep.mubr.bf16.mxu0 %v1003
        %1762 = vmatmul.mubr.bf16.gmra.mrb[0].mxu0 %v1002
        %v1763 = vpop.f32.mrb[0].mxu0
        %v1764 = vadd.f32 %v1603, %v1763
        %v1765 = vpop.f32.mrb[0].mxu0
        %v1766 = vpop.f32.mrb[0].mxu0
        %v1767 = vadd.f32 %v1606, %v1766
        %v1768 = vpop.f32.mrb[0].mxu0
        %1769 = vmatprep.mubr.bf16.mxu0 %v1010
        %1770 = vmatmul.mubr.bf16.gmra.mrb[0].mxu0 %v1009
        %v1771 = vpop.f32.mrb[0].mxu0
        %v1772 = vadd.f32 %v1611, %v1771
        %v1773 = vpop.f32.mrb[0].mxu0
        %v1774 = vpop.f32.mrb[0].mxu0
        %v1775 = vadd.f32 %v1614, %v1774
        %v1776 = vpop.f32.mrb[0].mxu0
        %1777 = vmatprep.mubr.bf16.mxu0 %v1017
        %1778 = vmatmul.mubr.bf16.gmra.mrb[0].mxu0 %v1016
        %v1779 = vpop.f32.mrb[0].mxu0
        %v1780 = vadd.f32 %v1619, %v1779
        %v1781 = vpop.f32.mrb[0].mxu0
        %v1782 = vpop.f32.mrb[0].mxu0
        %v1783 = vadd.f32 %v1622, %v1782
        %v1784 = vpop.f32.mrb[0].mxu0
        %1785 = vmatprep.mubr.bf16.mxu0 %v1024
        %1786 = vmatmul.mubr.bf16.gmra.mrb[0].mxu0 %v1023
        %v1787 = vpop.f32.mrb[0].mxu0
        %v1788 = vadd.f32 %v1627, %v1787
        %v1789 = vpop.f32.mrb[0].mxu0
        %v1790 = vpop.f32.mrb[0].mxu0
        %v1791 = vadd.f32 %v1630, %v1790
        %v1792 = vpop.f32.mrb[0].mxu0
        %1793 = vmatprep.mubr.bf16.mxu0 %v1031
        %1794 = vmatmul.mubr.bf16.gmra.mrb[0].mxu0 %v1030
        %v1795 = vpop.f32.mrb[0].mxu0
        %v1796 = vadd.f32 %v1635, %v1795
        %v1797 = vpop.f32.mrb[0].mxu0
        %v1798 = vpop.f32.mrb[0].mxu0
        %v1799 = vadd.f32 %v1638, %v1798
        %v1800 = vpop.f32.mrb[0].mxu0
        %1801 = vmatprep.mubr.bf16.mxu0 %v1038
        %1802 = vmatmul.mubr.bf16.gmra.mrb[0].mxu0 %v1037
        %v1803 = vpop.f32.mrb[0].mxu0
        %v1804 = vadd.f32 %v1643, %v1803
        %v1805 = vpop.f32.mrb[0].mxu0
        %v1806 = vpop.f32.mrb[0].mxu0
        %v1807 = vadd.f32 %v1646, %v1806
        %v1808 = vpop.f32.mrb[0].mxu0
        %1809 = vmatprep.mubr.bf16.mxu0 %v1045
        %1810 = vmatmul.mubr.bf16.gmra.mrb[0].mxu0 %v1044
        %v1811 = vpop.f32.mrb[0].mxu0
        %v1812 = vadd.f32 %v1651, %v1811
        %v1813 = vpop.f32.mrb[0].mxu0
        %v1814 = vpop.f32.mrb[0].mxu0
        %v1815 = vadd.f32 %v1654, %v1814
        %v1816 = vpop.f32.mrb[0].mxu0
        %1817 = vmatprep.mubr.bf16.mxu0 %v1052
        %1818 = vmatmul.mubr.bf16.gmra.mrb[0].mxu0 %v1051
        %v1819 = vpop.f32.mrb[0].mxu0
        %v1820 = vadd.f32 %v1659, %v1819
        %v1821 = vpop.f32.mrb[0].mxu0
        %v1822 = vpop.f32.mrb[0].mxu0
        %v1823 = vadd.f32 %v1662, %v1822
        %v1824 = vpop.f32.mrb[0].mxu0
        %1825 = vdwg.mxu0
        %1826 = vmatprep.subr.bf16.mxu0 0
        %1827 = vmatpush1.bf16.msra.mxu0 %v1424
        %1828 = vmatprep.subr.bf16.mxu0 0
        %1829 = vmatpush1.bf16.msra.mxu0 %v1425
        %1830 = vmatprep.subr.bf16.mxu0 0
        %1831 = vmatpush1.bf16.msra.mxu0 %v1426
        %1832 = vmatprep.subr.bf16.mxu0 0
        %1833 = vmatpush1.bf16.msra.mxu0 %v1427
        %1834 = vmatprep.subr.bf16.mxu0 0
        %1835 = vmatpush1.bf16.msra.mxu0 %v1428
        %1836 = vmatprep.subr.bf16.mxu0 0
        %1837 = vmatpush1.bf16.msra.mxu0 %v1429
        %1838 = vmatprep.subr.bf16.mxu0 0
        %1839 = vmatpush1.bf16.msra.mxu0 %v1430
        %1840 = vmatprep.subr.bf16.mxu0 0
        %1841 = vmatpush1.bf16.msra.mxu0 %v1431
        %1842 = vmatprep.subr.bf16.mxu0 0
        %1843 = vmatpush1.bf16.msra.mxu0 %v1432
        %1844 = vmatprep.subr.bf16.mxu0 0
        %1845 = vmatpush1.bf16.msra.mxu0 %v1433
        %1846 = vmatprep.subr.bf16.mxu0 0
        %1847 = vmatpush1.bf16.msra.mxu0 %v1434
        %1848 = vmatprep.subr.bf16.mxu0 0
        %1849 = vmatpush1.bf16.msra.mxu0 %v1435
        %1850 = vmatprep.subr.bf16.mxu0 0
        %1851 = vmatpush1.bf16.msra.mxu0 %v1436
        %1852 = vmatprep.subr.bf16.mxu0 0
        %1853 = vmatpush1.bf16.msra.mxu0 %v1437
        %1854 = vmatprep.subr.bf16.mxu0 0
        %1855 = vmatpush1.bf16.msra.mxu0 %v1438
        %1856 = vmatprep.subr.bf16.mxu0 0
        %1857 = vmatpush1.bf16.msra.mxu0 %v1439
        %1858 = vmatprep.mubr.bf16.mxu0 %v949
        %1859 = vmatmul.mubr.bf16.gmra.mrb[0].mxu0 %v948
        %v1860 = vpop.f32.mrb[0].mxu0
        %v1861 = vadd.f32 %v1700, %v1860
        %v1862 = vpop.f32.mrb[0].mxu0
        %v1863 = vpop.f32.mrb[0].mxu0
        %v1864 = vadd.f32 %v1703, %v1863
        %v1865 = vpop.f32.mrb[0].mxu0
        %1866 = vmatprep.mubr.bf16.mxu0 %v956
        %1867 = vmatmul.mubr.bf16.gmra.mrb[0].mxu0 %v955
        %v1868 = vpop.f32.mrb[0].mxu0
        %v1869 = vadd.f32 %v1708, %v1868
        %v1870 = vpop.f32.mrb[0].mxu0
        %v1871 = vpop.f32.mrb[0].mxu0
        %v1872 = vadd.f32 %v1711, %v1871
        %v1873 = vpop.f32.mrb[0].mxu0
        %1874 = vmatprep.mubr.bf16.mxu0 %v963
        %1875 = vmatmul.mubr.bf16.gmra.mrb[0].mxu0 %v962
        %v1876 = vpop.f32.mrb[0].mxu0
        %v1877 = vadd.f32 %v1716, %v1876
        %v1878 = vpop.f32.mrb[0].mxu0
        %v1879 = vpop.f32.mrb[0].mxu0
        %v1880 = vadd.f32 %v1719, %v1879
        %v1881 = vpop.f32.mrb[0].mxu0
        %1882 = vmatprep.mubr.bf16.mxu0 %v970
        %1883 = vmatmul.mubr.bf16.gmra.mrb[0].mxu0 %v969
        %v1884 = vpop.f32.mrb[0].mxu0
        %v1885 = vadd.f32 %v1724, %v1884
        %v1886 = vpop.f32.mrb[0].mxu0
        %v1887 = vpop.f32.mrb[0].mxu0
        %v1888 = vadd.f32 %v1727, %v1887
        %v1889 = vpop.f32.mrb[0].mxu0
        %1890 = vmatprep.mubr.bf16.mxu0 %v977
        %1891 = vmatmul.mubr.bf16.gmra.mrb[0].mxu0 %v976
        %v1892 = vpop.f32.mrb[0].mxu0
        %v1893 = vadd.f32 %v1732, %v1892
        %v1894 = vpop.f32.mrb[0].mxu0
        %v1895 = vpop.f32.mrb[0].mxu0
        %v1896 = vadd.f32 %v1735, %v1895
        %v1897 = vpop.f32.mrb[0].mxu0
        %1898 = vmatprep.mubr.bf16.mxu0 %v984
        %1899 = vmatmul.mubr.bf16.gmra.mrb[0].mxu0 %v983
        %v1900 = vpop.f32.mrb[0].mxu0
        %v1901 = vadd.f32 %v1740, %v1900
        %v1902 = vpop.f32.mrb[0].mxu0
        %v1903 = vpop.f32.mrb[0].mxu0
        %v1904 = vadd.f32 %v1743, %v1903
        %v1905 = vpop.f32.mrb[0].mxu0
        %1906 = vmatprep.mubr.bf16.mxu0 %v991
        %1907 = vmatmul.mubr.bf16.gmra.mrb[0].mxu0 %v990
        %v1908 = vpop.f32.mrb[0].mxu0
        %v1909 = vadd.f32 %v1748, %v1908
        %v1910 = vpop.f32.mrb[0].mxu0
        %v1911 = vpop.f32.mrb[0].mxu0
        %v1912 = vadd.f32 %v1751, %v1911
        %v1913 = vpop.f32.mrb[0].mxu0
        %1914 = vmatprep.mubr.bf16.mxu0 %v998
        %1915 = vmatmul.mubr.bf16.gmra.mrb[0].mxu0 %v997
        %v1916 = vpop.f32.mrb[0].mxu0
        %v1917 = vadd.f32 %v1756, %v1916
        %v1918 = vpop.f32.mrb[0].mxu0
        %v1919 = vpop.f32.mrb[0].mxu0
        %v1920 = vadd.f32 %v1759, %v1919
        %v1921 = vpop.f32.mrb[0].mxu0
        %1922 = vmatprep.mubr.bf16.mxu0 %v1005
        %1923 = vmatmul.mubr.bf16.gmra.mrb[0].mxu0 %v1004
        %v1924 = vpop.f32.mrb[0].mxu0
        %v1925 = vadd.f32 %v1764, %v1924
        %v1926 = vpop.f32.mrb[0].mxu0
        %v1927 = vpop.f32.mrb[0].mxu0
        %v1928 = vadd.f32 %v1767, %v1927
        %v1929 = vpop.f32.mrb[0].mxu0
        %1930 = vmatprep.mubr.bf16.mxu0 %v1012
        %1931 = vmatmul.mubr.bf16.gmra.mrb[0].mxu0 %v1011
        %v1932 = vpop.f32.mrb[0].mxu0
        %v1933 = vadd.f32 %v1772, %v1932
        %v1934 = vpop.f32.mrb[0].mxu0
        %v1935 = vpop.f32.mrb[0].mxu0
        %v1936 = vadd.f32 %v1775, %v1935
        %v1937 = vpop.f32.mrb[0].mxu0
        %1938 = vmatprep.mubr.bf16.mxu0 %v1019
        %1939 = vmatmul.mubr.bf16.gmra.mrb[0].mxu0 %v1018
        %v1940 = vpop.f32.mrb[0].mxu0
        %v1941 = vadd.f32 %v1780, %v1940
        %v1942 = vpop.f32.mrb[0].mxu0
        %v1943 = vpop.f32.mrb[0].mxu0
        %v1944 = vadd.f32 %v1783, %v1943
        %v1945 = vpop.f32.mrb[0].mxu0
        %1946 = vmatprep.mubr.bf16.mxu0 %v1026
        %1947 = vmatmul.mubr.bf16.gmra.mrb[0].mxu0 %v1025
        %v1948 = vpop.f32.mrb[0].mxu0
        %v1949 = vadd.f32 %v1788, %v1948
        %v1950 = vpop.f32.mrb[0].mxu0
        %v1951 = vpop.f32.mrb[0].mxu0
        %v1952 = vadd.f32 %v1791, %v1951
        %v1953 = vpop.f32.mrb[0].mxu0
        %1954 = vmatprep.mubr.bf16.mxu0 %v1033
        %1955 = vmatmul.mubr.bf16.gmra.mrb[0].mxu0 %v1032
        %v1956 = vpop.f32.mrb[0].mxu0
        %v1957 = vadd.f32 %v1796, %v1956
        %v1958 = vpop.f32.mrb[0].mxu0
        %v1959 = vpop.f32.mrb[0].mxu0
        %v1960 = vadd.f32 %v1799, %v1959
        %v1961 = vpop.f32.mrb[0].mxu0
        %1962 = vmatprep.mubr.bf16.mxu0 %v1040
        %1963 = vmatmul.mubr.bf16.gmra.mrb[0].mxu0 %v1039
        %v1964 = vpop.f32.mrb[0].mxu0
        %v1965 = vadd.f32 %v1804, %v1964
        %v1966 = vpop.f32.mrb[0].mxu0
        %v1967 = vpop.f32.mrb[0].mxu0
        %v1968 = vadd.f32 %v1807, %v1967
        %v1969 = vpop.f32.mrb[0].mxu0
        %1970 = vmatprep.mubr.bf16.mxu0 %v1047
        %1971 = vmatmul.mubr.bf16.gmra.mrb[0].mxu0 %v1046
        %v1972 = vpop.f32.mrb[0].mxu0
        %v1973 = vadd.f32 %v1812, %v1972
        %v1974 = vpop.f32.mrb[0].mxu0
        %v1975 = vpop.f32.mrb[0].mxu0
        %v1976 = vadd.f32 %v1815, %v1975
        %v1977 = vpop.f32.mrb[0].mxu0
        %1978 = vmatprep.mubr.bf16.mxu0 %v1054
        %1979 = vmatmul.mubr.bf16.gmra.mrb[0].mxu0 %v1053
        %v1980 = vpop.f32.mrb[0].mxu0
        %v1981 = vadd.f32 %v1820, %v1980
        %v1982 = vpop.f32.mrb[0].mxu0
        %v1983 = vpop.f32.mrb[0].mxu0
        %v1984 = vadd.f32 %v1823, %v1983
        %v1985 = vpop.f32.mrb[0].mxu0
        %1986 = vdwg.mxu0
        %1987 = vmatprep.subr.bf16.mxu0 0
        %1988 = vmatpush1.bf16.msra.mxu0 %v1440
        %1989 = vmatprep.subr.bf16.mxu0 0
        %1990 = vmatpush1.bf16.msra.mxu0 %v1441
        %1991 = vmatprep.subr.bf16.mxu0 0
        %1992 = vmatpush1.bf16.msra.mxu0 %v1442
        %1993 = vmatprep.subr.bf16.mxu0 0
        %1994 = vmatpush1.bf16.msra.mxu0 %v1443
        %1995 = vmatprep.subr.bf16.mxu0 0
        %1996 = vmatpush1.bf16.msra.mxu0 %v1444
        %1997 = vmatprep.subr.bf16.mxu0 0
        %1998 = vmatpush1.bf16.msra.mxu0 %v1445
        %1999 = vmatprep.subr.bf16.mxu0 0
        %2000 = vmatpush1.bf16.msra.mxu0 %v1446
        %2001 = vmatprep.subr.bf16.mxu0 0
        %2002 = vmatpush1.bf16.msra.mxu0 %v1447
        %2003 = vmatprep.subr.bf16.mxu0 0
        %2004 = vmatpush1.bf16.msra.mxu0 0
        %2005 = vmatprep.subr.bf16.mxu0 0
        %2006 = vmatpush1.bf16.msra.mxu0 0
        %2007 = vmatprep.subr.bf16.mxu0 0
        %2008 = vmatpush1.bf16.msra.mxu0 0
        %2009 = vmatprep.subr.bf16.mxu0 0
        %2010 = vmatpush1.bf16.msra.mxu0 0
        %2011 = vmatprep.subr.bf16.mxu0 0
        %2012 = vmatpush1.bf16.msra.mxu0 0
        %2013 = vmatprep.subr.bf16.mxu0 0
        %2014 = vmatpush1.bf16.msra.mxu0 0
        %2015 = vmatprep.subr.bf16.mxu0 0
        %2016 = vmatpush1.bf16.msra.mxu0 0
        %2017 = vmatprep.subr.bf16.mxu0 0
        %2018 = vmatpush1.bf16.msra.mxu0 0
        %2019 = vmatprep.mubr.bf16.mxu0 0
        %2020 = vmatmul.mubr.bf16.gmra.mrb[0].mxu0 %v950
        %v2021 = vpop.f32.mrb[0].mxu0
        %v2022 = vadd.f32 %v1861, %v2021
        %v2023 = vpop.f32.mrb[0].mxu0
        %v2024 = vpop.f32.mrb[0].mxu0
        %v2025 = vadd.f32 %v1864, %v2024
        %v2026 = vpop.f32.mrb[0].mxu0
        %2027 = vmatprep.mubr.bf16.mxu0 0
        %2028 = vmatmul.mubr.bf16.gmra.mrb[0].mxu0 %v957
        %v2029 = vpop.f32.mrb[0].mxu0
        %v2030 = vadd.f32 %v1869, %v2029
        %v2031 = vpop.f32.mrb[0].mxu0
        %v2032 = vpop.f32.mrb[0].mxu0
        %v2033 = vadd.f32 %v1872, %v2032
        %v2034 = vpop.f32.mrb[0].mxu0
        %2035 = vmatprep.mubr.bf16.mxu0 0
        %2036 = vmatmul.mubr.bf16.gmra.mrb[0].mxu0 %v964
        %v2037 = vpop.f32.mrb[0].mxu0
        %v2038 = vadd.f32 %v1877, %v2037
        %v2039 = vpop.f32.mrb[0].mxu0
        %v2040 = vpop.f32.mrb[0].mxu0
        %v2041 = vadd.f32 %v1880, %v2040
        %v2042 = vpop.f32.mrb[0].mxu0
        %2043 = vmatprep.mubr.bf16.mxu0 0
        %2044 = vmatmul.mubr.bf16.gmra.mrb[0].mxu0 %v971
        %v2045 = vpop.f32.mrb[0].mxu0
        %v2046 = vadd.f32 %v1885, %v2045
        %v2047 = vpop.f32.mrb[0].mxu0
        %v2048 = vpop.f32.mrb[0].mxu0
        %v2049 = vadd.f32 %v1888, %v2048
        %v2050 = vpop.f32.mrb[0].mxu0
        %2051 = vmatprep.mubr.bf16.mxu0 0
        %2052 = vmatmul.mubr.bf16.gmra.mrb[0].mxu0 %v978
        %v2053 = vpop.f32.mrb[0].mxu0
        %v2054 = vadd.f32 %v1893, %v2053
        %v2055 = vpop.f32.mrb[0].mxu0
        %v2056 = vpop.f32.mrb[0].mxu0
        %v2057 = vadd.f32 %v1896, %v2056
        %v2058 = vpop.f32.mrb[0].mxu0
        %2059 = vmatprep.mubr.bf16.mxu0 0
        %2060 = vmatmul.mubr.bf16.gmra.mrb[0].mxu0 %v985
        %v2061 = vpop.f32.mrb[0].mxu0
        %v2062 = vadd.f32 %v1901, %v2061
        %v2063 = vpop.f32.mrb[0].mxu0
        %v2064 = vpop.f32.mrb[0].mxu0
        %v2065 = vadd.f32 %v1904, %v2064
        %v2066 = vpop.f32.mrb[0].mxu0
        %2067 = vmatprep.mubr.bf16.mxu0 0
        %2068 = vmatmul.mubr.bf16.gmra.mrb[0].mxu0 %v992
        %v2069 = vpop.f32.mrb[0].mxu0
        %v2070 = vadd.f32 %v1909, %v2069
        %v2071 = vpop.f32.mrb[0].mxu0
        %v2072 = vpop.f32.mrb[0].mxu0
        %v2073 = vadd.f32 %v1912, %v2072
        %v2074 = vpop.f32.mrb[0].mxu0
        %2075 = vmatprep.mubr.bf16.mxu0 0
        %2076 = vmatmul.mubr.bf16.gmra.mrb[0].mxu0 %v999
        %v2077 = vpop.f32.mrb[0].mxu0
        %v2078 = vadd.f32 %v1917, %v2077
        %v2079 = vpop.f32.mrb[0].mxu0
        %v2080 = vpop.f32.mrb[0].mxu0
        %v2081 = vadd.f32 %v1920, %v2080
        %v2082 = vpop.f32.mrb[0].mxu0
        %2083 = vmatprep.mubr.bf16.mxu0 0
        %2084 = vmatmul.mubr.bf16.gmra.mrb[0].mxu0 %v1006
        %v2085 = vpop.f32.mrb[0].mxu0
        %v2086 = vadd.f32 %v1925, %v2085
        %v2087 = vpop.f32.mrb[0].mxu0
        %v2088 = vpop.f32.mrb[0].mxu0
        %v2089 = vadd.f32 %v1928, %v2088
        %v2090 = vpop.f32.mrb[0].mxu0
        %2091 = vmatprep.mubr.bf16.mxu0 0
        %2092 = vmatmul.mubr.bf16.gmra.mrb[0].mxu0 %v1013
        %v2093 = vpop.f32.mrb[0].mxu0
        %v2094 = vadd.f32 %v1933, %v2093
        %v2095 = vpop.f32.mrb[0].mxu0
        %v2096 = vpop.f32.mrb[0].mxu0
        %v2097 = vadd.f32 %v1936, %v2096
        %v2098 = vpop.f32.mrb[0].mxu0
        %2099 = vmatprep.mubr.bf16.mxu0 0
        %2100 = vmatmul.mubr.bf16.gmra.mrb[0].mxu0 %v1020
        %v2101 = vpop.f32.mrb[0].mxu0
        %v2102 = vadd.f32 %v1941, %v2101
        %v2103 = vpop.f32.mrb[0].mxu0
        %v2104 = vpop.f32.mrb[0].mxu0
        %v2105 = vadd.f32 %v1944, %v2104
        %v2106 = vpop.f32.mrb[0].mxu0
        %2107 = vmatprep.mubr.bf16.mxu0 0
        %2108 = vmatmul.mubr.bf16.gmra.mrb[0].mxu0 %v1027
        %v2109 = vpop.f32.mrb[0].mxu0
        %v2110 = vadd.f32 %v1949, %v2109
        %v2111 = vpop.f32.mrb[0].mxu0
        %v2112 = vpop.f32.mrb[0].mxu0
        %v2113 = vadd.f32 %v1952, %v2112
        %v2114 = vpop.f32.mrb[0].mxu0
        %2115 = vmatprep.mubr.bf16.mxu0 0
        %2116 = vmatmul.mubr.bf16.gmra.mrb[0].mxu0 %v1034
        %v2117 = vpop.f32.mrb[0].mxu0
        %v2118 = vadd.f32 %v1957, %v2117
        %v2119 = vpop.f32.mrb[0].mxu0
        %v2120 = vpop.f32.mrb[0].mxu0
        %v2121 = vadd.f32 %v1960, %v2120
        %v2122 = vpop.f32.mrb[0].mxu0
        %2123 = vmatprep.mubr.bf16.mxu0 0
        %2124 = vmatmul.mubr.bf16.gmra.mrb[0].mxu0 %v1041
        %v2125 = vpop.f32.mrb[0].mxu0
        %v2126 = vadd.f32 %v1965, %v2125
        %v2127 = vpop.f32.mrb[0].mxu0
        %v2128 = vpop.f32.mrb[0].mxu0
        %v2129 = vadd.f32 %v1968, %v2128
        %v2130 = vpop.f32.mrb[0].mxu0
        %2131 = vmatprep.mubr.bf16.mxu0 0
        %2132 = vmatmul.mubr.bf16.gmra.mrb[0].mxu0 %v1048
        %v2133 = vpop.f32.mrb[0].mxu0
        %v2134 = vadd.f32 %v1973, %v2133
        %v2135 = vpop.f32.mrb[0].mxu0
        %v2136 = vpop.f32.mrb[0].mxu0
        %v2137 = vadd.f32 %v1976, %v2136
        %v2138 = vpop.f32.mrb[0].mxu0
        %2139 = vmatprep.mubr.bf16.mxu0 0
        %2140 = vmatmul.mubr.bf16.gmra.mrb[0].mxu0 %v1055
        %v2141 = vpop.f32.mrb[0].mxu0
        %v2142 = vadd.f32 %v1981, %v2141
        %v2143 = vpop.f32.mrb[0].mxu0
        %v2144 = vpop.f32.mrb[0].mxu0
        %v2145 = vadd.f32 %v1984, %v2144
        %v2146 = vpop.f32.mrb[0].mxu0
        %2147 = vdwg.mxu0
        %v2148 = vmax.f32 %v2022, 0.0
        %v2149 = vmax.f32 %v2025, 0.0
        %v2150 = vmax.f32 %v2030, 0.0
        %v2151 = vmax.f32 %v2033, 0.0
        %v2152 = vmax.f32 %v2038, 0.0
        %v2153 = vmax.f32 %v2041, 0.0
        %v2154 = vmax.f32 %v2046, 0.0
        %v2155 = vmax.f32 %v2049, 0.0
        %v2156 = vmax.f32 %v2054, 0.0
        %v2157 = vmax.f32 %v2057, 0.0
        %v2158 = vmax.f32 %v2062, 0.0
        %v2159 = vmax.f32 %v2065, 0.0
        %v2160 = vmax.f32 %v2070, 0.0
        %v2161 = vmax.f32 %v2073, 0.0
        %v2162 = vmax.f32 %v2078, 0.0
        %v2163 = vmax.f32 %v2081, 0.0
        %v2164 = vmax.f32 %v2086, 0.0
        %v2165 = vmax.f32 %v2089, 0.0
        %v2166 = vmax.f32 %v2094, 0.0
        %v2167 = vmax.f32 %v2097, 0.0
        %v2168 = vmax.f32 %v2102, 0.0
        %v2169 = vmax.f32 %v2105, 0.0
        %v2170 = vmax.f32 %v2110, 0.0
        %v2171 = vmax.f32 %v2113, 0.0
        %v2172 = vmax.f32 %v2118, 0.0
        %v2173 = vmax.f32 %v2121, 0.0
        %v2174 = vmax.f32 %v2126, 0.0
        %v2175 = vmax.f32 %v2129, 0.0
        %v2176 = vmax.f32 %v2134, 0.0
        %v2177 = vmax.f32 %v2137, 0.0
        %v2178 = vmax.f32 %v2142, 0.0
        %v2179 = vmax.f32 %v2145, 0.0
        %v2180 = vpack.c.bf16 %v2149, %v2148
        %v2181 = vpack.c.bf16 %v2151, %v2150
        %v2182 = vpack.c.bf16 %v2153, %v2152
        %v2183 = vpack.c.bf16 %v2155, %v2154
        %v2184 = vpack.c.bf16 %v2157, %v2156
        %v2185 = vpack.c.bf16 %v2159, %v2158
        %v2186 = vpack.c.bf16 %v2161, %v2160
        %v2187 = vpack.c.bf16 %v2163, %v2162
        %v2188 = vpack.c.bf16 %v2165, %v2164
        %v2189 = vpack.c.bf16 %v2167, %v2166
        %v2190 = vpack.c.bf16 %v2169, %v2168
        %v2191 = vpack.c.bf16 %v2171, %v2170
        %v2192 = vpack.c.bf16 %v2173, %v2172
        %v2193 = vpack.c.bf16 %v2175, %v2174
        %v2194 = vpack.c.bf16 %v2177, %v2176
        %v2195 = vpack.c.bf16 %v2179, %v2178
        %v2196 = vld [vmem:[#allocation7] sm:$0xf]
        %v2197 = vld [vmem:[#allocation7 + $0x4] sm:$0xf]
        %v2198 = vld [vmem:[#allocation7 + $0x8] sm:$0xf]
        %v2199 = vld [vmem:[#allocation7 + $0xc] sm:$0xf]
        %v2200 = vld [vmem:[#allocation7 + $0x10] sm:$0xf]
        %v2201 = vld [vmem:[#allocation7 + $0x14] sm:$0xf]
        %v2202 = vld [vmem:[#allocation7 + $0x18] sm:$0xf]
        %v2203 = vld [vmem:[#allocation7 + $0x1c] sm:$0xf]
        %v2204 = vld [vmem:[#allocation7 + $0x20] sm:$0xf]
        %v2205 = vld [vmem:[#allocation7 + $0x24] sm:$0xf]
        %v2206 = vld [vmem:[#allocation7 + $0x28] sm:$0xf]
        %v2207 = vld [vmem:[#allocation7 + $0x2c] sm:$0xf]
        %v2208 = vld [vmem:[#allocation7 + $0x30] sm:$0xf]
        %v2209 = vld [vmem:[#allocation7 + $0x34] sm:$0xf]
        %v2210 = vld [vmem:[#allocation7 + $0x38] sm:$0xf]
        %v2211 = vld [vmem:[#allocation7 + $0x3c] sm:$0xf]
        %v2212 = vld [vmem:[%s4] sm:$0x1]
        %v2214 = vlaneseq
        %v2215 = vshrl.u32 %v2214, 7
        %v2216 = vsub.s32 0, %v2215
        %v2217 = vrot.slane %v2212, %v2216
        %v2235 = vunpack.c.l.b16 %v2196
        %v2236 = vunpack.c.l.b16 %v2197
        %v2237 = vunpack.c.l.b16 %v2198
        %v2238 = vunpack.c.l.b16 %v2199
        %v2239 = vunpack.c.l.b16 %v2200
        %v2240 = vunpack.c.l.b16 %v2201
        %v2241 = vunpack.c.l.b16 %v2202
        %v2242 = vunpack.c.l.b16 %v2203
        %v2243 = vunpack.c.l.b16 %v2204
        %v2244 = vunpack.c.l.b16 %v2205
        %v2245 = vunpack.c.l.b16 %v2206
        %v2246 = vunpack.c.l.b16 %v2207
        %v2247 = vunpack.c.l.b16 %v2208
        %v2248 = vunpack.c.l.b16 %v2209
        %v2249 = vunpack.c.l.b16 %v2210
        %v2250 = vunpack.c.l.b16 %v2211
        %v2251 = vpack.c.b16 %v2236, %v2235
        %v2252 = vpack.c.b16 %v2238, %v2237
        %v2253 = vpack.c.b16 %v2240, %v2239
        %v2254 = vpack.c.b16 %v2242, %v2241
        %v2255 = vpack.c.b16 %v2244, %v2243
        %v2256 = vpack.c.b16 %v2246, %v2245
        %v2257 = vpack.c.b16 %v2248, %v2247
        %v2258 = vpack.c.b16 %v2250, %v2249
        %2267 = vmatprep.subr.bf16.mxu0 0
        %2268 = vmatpush1.bf16.msra.mxu0 %v2251
        %2269 = vmatprep.subr.bf16.mxu0 0
        %2270 = vmatpush1.bf16.msra.mxu0 %v2252
        %2271 = vmatprep.subr.bf16.mxu0 0
        %2272 = vmatpush1.bf16.msra.mxu0 %v2253
        %2273 = vmatprep.subr.bf16.mxu0 0
        %2274 = vmatpush1.bf16.msra.mxu0 %v2254
        %2275 = vmatprep.subr.bf16.mxu0 0
        %2276 = vmatpush1.bf16.msra.mxu0 %v2255
        %2277 = vmatprep.subr.bf16.mxu0 0
        %2278 = vmatpush1.bf16.msra.mxu0 %v2256
        %2279 = vmatprep.subr.bf16.mxu0 0
        %2280 = vmatpush1.bf16.msra.mxu0 %v2257
        %2281 = vmatprep.subr.bf16.mxu0 0
        %2282 = vmatpush1.bf16.msra.mxu0 %v2258
        %2283 = vmatprep.subr.bf16.mxu0 0
        %2284 = vmatpush1.bf16.msra.mxu0 0
        %2285 = vmatprep.subr.bf16.mxu0 0
        %2286 = vmatpush1.bf16.msra.mxu0 0
        %2287 = vmatprep.subr.bf16.mxu0 0
        %2288 = vmatpush1.bf16.msra.mxu0 0
        %2289 = vmatprep.subr.bf16.mxu0 0
        %2290 = vmatpush1.bf16.msra.mxu0 0
        %2291 = vmatprep.subr.bf16.mxu0 0
        %2292 = vmatpush1.bf16.msra.mxu0 0
        %2293 = vmatprep.subr.bf16.mxu0 0
        %2294 = vmatpush1.bf16.msra.mxu0 0
        %2295 = vmatprep.subr.bf16.mxu0 0
        %2296 = vmatpush1.bf16.msra.mxu0 0
        %2297 = vmatprep.subr.bf16.mxu0 0
        %2298 = vmatpush1.bf16.msra.mxu0 0
        %2299 = vmatprep.mubr.bf16.mxu0 0
        %2300 = vmatmul.mubr.bf16.gmra.mrb[0].mxu0 %v2180
        %v2301 = vpop.f32.mrb[0].mxu0
        %v2302 = vadd.f32 %v2217, %v2301
        %v2303 = vpop.f32.mrb[0].mxu0
        %v2304 = vpop.f32.mrb[0].mxu0
        %v2305 = vadd.f32 %v2217, %v2304
        %v2306 = vpop.f32.mrb[0].mxu0
        %2307 = vmatprep.mubr.bf16.mxu0 0
        %2308 = vmatmul.mubr.bf16.gmra.mrb[0].mxu0 %v2181
        %v2309 = vpop.f32.mrb[0].mxu0
        %v2310 = vadd.f32 %v2217, %v2309
        %v2311 = vpop.f32.mrb[0].mxu0
        %v2312 = vpop.f32.mrb[0].mxu0
        %v2313 = vadd.f32 %v2217, %v2312
        %v2314 = vpop.f32.mrb[0].mxu0
        %2315 = vmatprep.mubr.bf16.mxu0 0
        %2316 = vmatmul.mubr.bf16.gmra.mrb[0].mxu0 %v2182
        %v2317 = vpop.f32.mrb[0].mxu0
        %v2318 = vadd.f32 %v2217, %v2317
        %v2319 = vpop.f32.mrb[0].mxu0
        %v2320 = vpop.f32.mrb[0].mxu0
        %v2321 = vadd.f32 %v2217, %v2320
        %v2322 = vpop.f32.mrb[0].mxu0
        %2323 = vmatprep.mubr.bf16.mxu0 0
        %2324 = vmatmul.mubr.bf16.gmra.mrb[0].mxu0 %v2183
        %v2325 = vpop.f32.mrb[0].mxu0
        %v2326 = vadd.f32 %v2217, %v2325
        %v2327 = vpop.f32.mrb[0].mxu0
        %v2328 = vpop.f32.mrb[0].mxu0
        %v2329 = vadd.f32 %v2217, %v2328
        %v2330 = vpop.f32.mrb[0].mxu0
        %2331 = vmatprep.mubr.bf16.mxu0 0
        %2332 = vmatmul.mubr.bf16.gmra.mrb[0].mxu0 %v2184
        %v2333 = vpop.f32.mrb[0].mxu0
        %v2334 = vadd.f32 %v2217, %v2333
        %v2335 = vpop.f32.mrb[0].mxu0
        %v2336 = vpop.f32.mrb[0].mxu0
        %v2337 = vadd.f32 %v2217, %v2336
        %v2338 = vpop.f32.mrb[0].mxu0
        %2339 = vmatprep.mubr.bf16.mxu0 0
        %2340 = vmatmul.mubr.bf16.gmra.mrb[0].mxu0 %v2185
        %v2341 = vpop.f32.mrb[0].mxu0
        %v2342 = vadd.f32 %v2217, %v2341
        %v2343 = vpop.f32.mrb[0].mxu0
        %v2344 = vpop.f32.mrb[0].mxu0
        %v2345 = vadd.f32 %v2217, %v2344
        %v2346 = vpop.f32.mrb[0].mxu0
        %2347 = vmatprep.mubr.bf16.mxu0 0
        %2348 = vmatmul.mubr.bf16.gmra.mrb[0].mxu0 %v2186
        %v2349 = vpop.f32.mrb[0].mxu0
        %v2350 = vadd.f32 %v2217, %v2349
        %v2351 = vpop.f32.mrb[0].mxu0
        %v2352 = vpop.f32.mrb[0].mxu0
        %v2353 = vadd.f32 %v2217, %v2352
        %v2354 = vpop.f32.mrb[0].mxu0
        %2355 = vmatprep.mubr.bf16.mxu0 0
        %2356 = vmatmul.mubr.bf16.gmra.mrb[0].mxu0 %v2187
        %v2357 = vpop.f32.mrb[0].mxu0
        %v2358 = vadd.f32 %v2217, %v2357
        %v2359 = vpop.f32.mrb[0].mxu0
        %v2360 = vpop.f32.mrb[0].mxu0
        %v2361 = vadd.f32 %v2217, %v2360
        %v2362 = vpop.f32.mrb[0].mxu0
        %2363 = vmatprep.mubr.bf16.mxu0 0
        %2364 = vmatmul.mubr.bf16.gmra.mrb[0].mxu0 %v2188
        %v2365 = vpop.f32.mrb[0].mxu0
        %v2366 = vadd.f32 %v2217, %v2365
        %v2367 = vpop.f32.mrb[0].mxu0
        %v2368 = vpop.f32.mrb[0].mxu0
        %v2369 = vadd.f32 %v2217, %v2368
        %v2370 = vpop.f32.mrb[0].mxu0
        %2371 = vmatprep.mubr.bf16.mxu0 0
        %2372 = vmatmul.mubr.bf16.gmra.mrb[0].mxu0 %v2189
        %v2373 = vpop.f32.mrb[0].mxu0
        %v2374 = vadd.f32 %v2217, %v2373
        %v2375 = vpop.f32.mrb[0].mxu0
        %v2376 = vpop.f32.mrb[0].mxu0
        %v2377 = vadd.f32 %v2217, %v2376
        %v2378 = vpop.f32.mrb[0].mxu0
        %2379 = vmatprep.mubr.bf16.mxu0 0
        %2380 = vmatmul.mubr.bf16.gmra.mrb[0].mxu0 %v2190
        %v2381 = vpop.f32.mrb[0].mxu0
        %v2382 = vadd.f32 %v2217, %v2381
        %v2383 = vpop.f32.mrb[0].mxu0
        %v2384 = vpop.f32.mrb[0].mxu0
        %v2385 = vadd.f32 %v2217, %v2384
        %v2386 = vpop.f32.mrb[0].mxu0
        %2387 = vmatprep.mubr.bf16.mxu0 0
        %2388 = vmatmul.mubr.bf16.gmra.mrb[0].mxu0 %v2191
        %v2389 = vpop.f32.mrb[0].mxu0
        %v2390 = vadd.f32 %v2217, %v2389
        %v2391 = vpop.f32.mrb[0].mxu0
        %v2392 = vpop.f32.mrb[0].mxu0
        %v2393 = vadd.f32 %v2217, %v2392
        %v2394 = vpop.f32.mrb[0].mxu0
        %2395 = vmatprep.mubr.bf16.mxu0 0
        %2396 = vmatmul.mubr.bf16.gmra.mrb[0].mxu0 %v2192
        %v2397 = vpop.f32.mrb[0].mxu0
        %v2398 = vadd.f32 %v2217, %v2397
        %v2399 = vpop.f32.mrb[0].mxu0
        %v2400 = vpop.f32.mrb[0].mxu0
        %v2401 = vadd.f32 %v2217, %v2400
        %v2402 = vpop.f32.mrb[0].mxu0
        %2403 = vmatprep.mubr.bf16.mxu0 0
        %2404 = vmatmul.mubr.bf16.gmra.mrb[0].mxu0 %v2193
        %v2405 = vpop.f32.mrb[0].mxu0
        %v2406 = vadd.f32 %v2217, %v2405
        %v2407 = vpop.f32.mrb[0].mxu0
        %v2408 = vpop.f32.mrb[0].mxu0
        %v2409 = vadd.f32 %v2217, %v2408
        %v2410 = vpop.f32.mrb[0].mxu0
        %2411 = vmatprep.mubr.bf16.mxu0 0
        %2412 = vmatmul.mubr.bf16.gmra.mrb[0].mxu0 %v2194
        %v2413 = vpop.f32.mrb[0].mxu0
        %v2414 = vadd.f32 %v2217, %v2413
        %v2415 = vpop.f32.mrb[0].mxu0
        %v2416 = vpop.f32.mrb[0].mxu0
        %v2417 = vadd.f32 %v2217, %v2416
        %v2418 = vpop.f32.mrb[0].mxu0
        %2419 = vmatprep.mubr.bf16.mxu0 0
        %2420 = vmatmul.mubr.bf16.gmra.mrb[0].mxu0 %v2195
        %v2421 = vpop.f32.mrb[0].mxu0
        %v2422 = vadd.f32 %v2217, %v2421
        %v2423 = vpop.f32.mrb[0].mxu0
        %v2424 = vpop.f32.mrb[0].mxu0
        %v2425 = vadd.f32 %v2217, %v2424
        %v2426 = vpop.f32.mrb[0].mxu0
        %2427 = vdwg.mxu0
        %v2428 = vmax.f32 %v2302, 0.0
        %v2429 = vmax.f32 %v2305, 0.0
        %v2430 = vmax.f32 %v2310, 0.0
        %v2431 = vmax.f32 %v2313, 0.0
        %v2432 = vmax.f32 %v2318, 0.0
        %v2433 = vmax.f32 %v2321, 0.0
        %v2434 = vmax.f32 %v2326, 0.0
        %v2435 = vmax.f32 %v2329, 0.0
        %v2436 = vmax.f32 %v2334, 0.0
        %v2437 = vmax.f32 %v2337, 0.0
        %v2438 = vmax.f32 %v2342, 0.0
        %v2439 = vmax.f32 %v2345, 0.0
        %v2440 = vmax.f32 %v2350, 0.0
        %v2441 = vmax.f32 %v2353, 0.0
        %v2442 = vmax.f32 %v2358, 0.0
        %v2443 = vmax.f32 %v2361, 0.0
        %v2444 = vmax.f32 %v2366, 0.0
        %v2445 = vmax.f32 %v2369, 0.0
        %v2446 = vmax.f32 %v2374, 0.0
        %v2447 = vmax.f32 %v2377, 0.0
        %v2448 = vmax.f32 %v2382, 0.0
        %v2449 = vmax.f32 %v2385, 0.0
        %v2450 = vmax.f32 %v2390, 0.0
        %v2451 = vmax.f32 %v2393, 0.0
        %v2452 = vmax.f32 %v2398, 0.0
        %v2453 = vmax.f32 %v2401, 0.0
        %v2454 = vmax.f32 %v2406, 0.0
        %v2455 = vmax.f32 %v2409, 0.0
        %v2456 = vmax.f32 %v2414, 0.0
        %v2457 = vmax.f32 %v2417, 0.0
        %v2458 = vmax.f32 %v2422, 0.0
        %v2459 = vmax.f32 %v2425, 0.0
        %v2460 = vpack.c.bf16 %v2429, %v2428
        %v2461 = vpack.c.bf16 %v2431, %v2430
        %v2462 = vpack.c.bf16 %v2433, %v2432
        %v2463 = vpack.c.bf16 %v2435, %v2434
        %v2464 = vpack.c.bf16 %v2437, %v2436
        %v2465 = vpack.c.bf16 %v2439, %v2438
        %v2466 = vpack.c.bf16 %v2441, %v2440
        %v2467 = vpack.c.bf16 %v2443, %v2442
        %v2468 = vpack.c.bf16 %v2445, %v2444
        %v2469 = vpack.c.bf16 %v2447, %v2446
        %v2470 = vpack.c.bf16 %v2449, %v2448
        %v2471 = vpack.c.bf16 %v2451, %v2450
        %v2472 = vpack.c.bf16 %v2453, %v2452
        %v2473 = vpack.c.bf16 %v2455, %v2454
        %v2474 = vpack.c.bf16 %v2457, %v2456
        %v2475 = vpack.c.bf16 %v2459, %v2458
        %v2476 = vld [vmem:[#allocation8] sm:$0xf]
        %v2477 = vld [vmem:[#allocation8 + $0x4] sm:$0xf]
        %v2478 = vld [vmem:[#allocation8 + $0x8] sm:$0xf]
        %v2479 = vld [vmem:[#allocation8 + $0xc] sm:$0xf]
        %v2480 = vld [vmem:[#allocation8 + $0x10] sm:$0xf]
        %v2481 = vld [vmem:[#allocation8 + $0x14] sm:$0xf]
        %v2482 = vld [vmem:[#allocation8 + $0x18] sm:$0xf]
        %v2483 = vld [vmem:[#allocation8 + $0x1c] sm:$0xf]
        %v2484 = vld [vmem:[#allocation8 + $0x20] sm:$0xf]
        %v2485 = vld [vmem:[#allocation8 + $0x24] sm:$0xf]
        %v2486 = vld [vmem:[#allocation8 + $0x28] sm:$0xf]
        %v2487 = vld [vmem:[#allocation8 + $0x2c] sm:$0xf]
        %v2488 = vld [vmem:[#allocation8 + $0x30] sm:$0xf]
        %v2489 = vld [vmem:[#allocation8 + $0x34] sm:$0xf]
        %v2490 = vld [vmem:[#allocation8 + $0x38] sm:$0xf]
        %v2491 = vld [vmem:[#allocation8 + $0x3c] sm:$0xf]
        %v2492 = vld [vmem:[%s6] sm:$0x1]
        %v2494 = vlaneseq
        %v2495 = vshrl.u32 %v2494, 7
        %v2496 = vsub.s32 0, %v2495
        %v2497 = vrot.slane %v2492, %v2496
        %v2515 = vunpack.c.l.b16 %v2476
        %v2516 = vunpack.c.l.b16 %v2477
        %v2517 = vunpack.c.l.b16 %v2478
        %v2518 = vunpack.c.l.b16 %v2479
        %v2519 = vunpack.c.l.b16 %v2480
        %v2520 = vunpack.c.l.b16 %v2481
        %v2521 = vunpack.c.l.b16 %v2482
        %v2522 = vunpack.c.l.b16 %v2483
        %v2523 = vunpack.c.l.b16 %v2484
        %v2524 = vunpack.c.l.b16 %v2485
        %v2525 = vunpack.c.l.b16 %v2486
        %v2526 = vunpack.c.l.b16 %v2487
        %v2527 = vunpack.c.l.b16 %v2488
        %v2528 = vunpack.c.l.b16 %v2489
        %v2529 = vunpack.c.l.b16 %v2490
        %v2530 = vunpack.c.l.b16 %v2491
        %v2531 = vpack.c.b16 %v2516, %v2515
        %v2532 = vpack.c.b16 %v2518, %v2517
        %v2533 = vpack.c.b16 %v2520, %v2519
        %v2534 = vpack.c.b16 %v2522, %v2521
        %v2535 = vpack.c.b16 %v2524, %v2523
        %v2536 = vpack.c.b16 %v2526, %v2525
        %v2537 = vpack.c.b16 %v2528, %v2527
        %v2538 = vpack.c.b16 %v2530, %v2529
        %2547 = vmatprep.subr.bf16.mxu0 0
        %2548 = vmatpush1.bf16.msra.mxu0 %v2531
        %2549 = vmatprep.subr.bf16.mxu0 0
        %2550 = vmatpush1.bf16.msra.mxu0 %v2532
        %2551 = vmatprep.subr.bf16.mxu0 0
        %2552 = vmatpush1.bf16.msra.mxu0 %v2533
        %2553 = vmatprep.subr.bf16.mxu0 0
        %2554 = vmatpush1.bf16.msra.mxu0 %v2534
        %2555 = vmatprep.subr.bf16.mxu0 0
        %2556 = vmatpush1.bf16.msra.mxu0 %v2535
        %2557 = vmatprep.subr.bf16.mxu0 0
        %2558 = vmatpush1.bf16.msra.mxu0 %v2536
        %2559 = vmatprep.subr.bf16.mxu0 0
        %2560 = vmatpush1.bf16.msra.mxu0 %v2537
        %2561 = vmatprep.subr.bf16.mxu0 0
        %2562 = vmatpush1.bf16.msra.mxu0 %v2538
        %2563 = vmatprep.subr.bf16.mxu0 0
        %2564 = vmatpush1.bf16.msra.mxu0 0
        %2565 = vmatprep.subr.bf16.mxu0 0
        %2566 = vmatpush1.bf16.msra.mxu0 0
        %2567 = vmatprep.subr.bf16.mxu0 0
        %2568 = vmatpush1.bf16.msra.mxu0 0
        %2569 = vmatprep.subr.bf16.mxu0 0
        %2570 = vmatpush1.bf16.msra.mxu0 0
        %2571 = vmatprep.subr.bf16.mxu0 0
        %2572 = vmatpush1.bf16.msra.mxu0 0
        %2573 = vmatprep.subr.bf16.mxu0 0
        %2574 = vmatpush1.bf16.msra.mxu0 0
        %2575 = vmatprep.subr.bf16.mxu0 0
        %2576 = vmatpush1.bf16.msra.mxu0 0
        %2577 = vmatprep.subr.bf16.mxu0 0
        %2578 = vmatpush1.bf16.msra.mxu0 0
        %2579 = vmatprep.mubr.bf16.mxu0 0
        %2580 = vmatmul.mubr.bf16.gmra.mrb[0].mxu0 %v2460
        %v2581 = vpop.f32.mrb[0].mxu0
        %v2582 = vadd.f32 %v2497, %v2581
        %v2583 = vpop.f32.mrb[0].mxu0
        %v2584 = vpop.f32.mrb[0].mxu0
        %v2585 = vadd.f32 %v2497, %v2584
        %v2586 = vpop.f32.mrb[0].mxu0
        %2587 = vmatprep.mubr.bf16.mxu0 0
        %2588 = vmatmul.mubr.bf16.gmra.mrb[0].mxu0 %v2461
        %v2589 = vpop.f32.mrb[0].mxu0
        %v2590 = vadd.f32 %v2497, %v2589
        %v2591 = vpop.f32.mrb[0].mxu0
        %v2592 = vpop.f32.mrb[0].mxu0
        %v2593 = vadd.f32 %v2497, %v2592
        %v2594 = vpop.f32.mrb[0].mxu0
        %2595 = vmatprep.mubr.bf16.mxu0 0
        %2596 = vmatmul.mubr.bf16.gmra.mrb[0].mxu0 %v2462
        %v2597 = vpop.f32.mrb[0].mxu0
        %v2598 = vadd.f32 %v2497, %v2597
        %v2599 = vpop.f32.mrb[0].mxu0
        %v2600 = vpop.f32.mrb[0].mxu0
        %v2601 = vadd.f32 %v2497, %v2600
        %v2602 = vpop.f32.mrb[0].mxu0
        %2603 = vmatprep.mubr.bf16.mxu0 0
        %2604 = vmatmul.mubr.bf16.gmra.mrb[0].mxu0 %v2463
        %v2605 = vpop.f32.mrb[0].mxu0
        %v2606 = vadd.f32 %v2497, %v2605
        %v2607 = vpop.f32.mrb[0].mxu0
        %v2608 = vpop.f32.mrb[0].mxu0
        %v2609 = vadd.f32 %v2497, %v2608
        %v2610 = vpop.f32.mrb[0].mxu0
        %2611 = vmatprep.mubr.bf16.mxu0 0
        %2612 = vmatmul.mubr.bf16.gmra.mrb[0].mxu0 %v2464
        %v2613 = vpop.f32.mrb[0].mxu0
        %v2614 = vadd.f32 %v2497, %v2613
        %v2615 = vpop.f32.mrb[0].mxu0
        %v2616 = vpop.f32.mrb[0].mxu0
        %v2617 = vadd.f32 %v2497, %v2616
        %v2618 = vpop.f32.mrb[0].mxu0
        %2619 = vmatprep.mubr.bf16.mxu0 0
        %2620 = vmatmul.mubr.bf16.gmra.mrb[0].mxu0 %v2465
        %v2621 = vpop.f32.mrb[0].mxu0
        %v2622 = vadd.f32 %v2497, %v2621
        %v2623 = vpop.f32.mrb[0].mxu0
        %v2624 = vpop.f32.mrb[0].mxu0
        %v2625 = vadd.f32 %v2497, %v2624
        %v2626 = vpop.f32.mrb[0].mxu0
        %2627 = vmatprep.mubr.bf16.mxu0 0
        %2628 = vmatmul.mubr.bf16.gmra.mrb[0].mxu0 %v2466
        %v2629 = vpop.f32.mrb[0].mxu0
        %v2630 = vadd.f32 %v2497, %v2629
        %v2631 = vpop.f32.mrb[0].mxu0
        %v2632 = vpop.f32.mrb[0].mxu0
        %v2633 = vadd.f32 %v2497, %v2632
        %v2634 = vpop.f32.mrb[0].mxu0
        %2635 = vmatprep.mubr.bf16.mxu0 0
        %2636 = vmatmul.mubr.bf16.gmra.mrb[0].mxu0 %v2467
        %v2637 = vpop.f32.mrb[0].mxu0
        %v2638 = vadd.f32 %v2497, %v2637
        %v2639 = vpop.f32.mrb[0].mxu0
        %v2640 = vpop.f32.mrb[0].mxu0
        %v2641 = vadd.f32 %v2497, %v2640
        %v2642 = vpop.f32.mrb[0].mxu0
        %2643 = vmatprep.mubr.bf16.mxu0 0
        %2644 = vmatmul.mubr.bf16.gmra.mrb[0].mxu0 %v2468
        %v2645 = vpop.f32.mrb[0].mxu0
        %v2646 = vadd.f32 %v2497, %v2645
        %v2647 = vpop.f32.mrb[0].mxu0
        %v2648 = vpop.f32.mrb[0].mxu0
        %v2649 = vadd.f32 %v2497, %v2648
        %v2650 = vpop.f32.mrb[0].mxu0
        %2651 = vmatprep.mubr.bf16.mxu0 0
        %2652 = vmatmul.mubr.bf16.gmra.mrb[0].mxu0 %v2469
        %v2653 = vpop.f32.mrb[0].mxu0
        %v2654 = vadd.f32 %v2497, %v2653
        %v2655 = vpop.f32.mrb[0].mxu0
        %v2656 = vpop.f32.mrb[0].mxu0
        %v2657 = vadd.f32 %v2497, %v2656
        %v2658 = vpop.f32.mrb[0].mxu0
        %2659 = vmatprep.mubr.bf16.mxu0 0
        %2660 = vmatmul.mubr.bf16.gmra.mrb[0].mxu0 %v2470
        %v2661 = vpop.f32.mrb[0].mxu0
        %v2662 = vadd.f32 %v2497, %v2661
        %v2663 = vpop.f32.mrb[0].mxu0
        %v2664 = vpop.f32.mrb[0].mxu0
        %v2665 = vadd.f32 %v2497, %v2664
        %v2666 = vpop.f32.mrb[0].mxu0
        %2667 = vmatprep.mubr.bf16.mxu0 0
        %2668 = vmatmul.mubr.bf16.gmra.mrb[0].mxu0 %v2471
        %v2669 = vpop.f32.mrb[0].mxu0
        %v2670 = vadd.f32 %v2497, %v2669
        %v2671 = vpop.f32.mrb[0].mxu0
        %v2672 = vpop.f32.mrb[0].mxu0
        %v2673 = vadd.f32 %v2497, %v2672
        %v2674 = vpop.f32.mrb[0].mxu0
        %2675 = vmatprep.mubr.bf16.mxu0 0
        %2676 = vmatmul.mubr.bf16.gmra.mrb[0].mxu0 %v2472
        %v2677 = vpop.f32.mrb[0].mxu0
        %v2678 = vadd.f32 %v2497, %v2677
        %v2679 = vpop.f32.mrb[0].mxu0
        %v2680 = vpop.f32.mrb[0].mxu0
        %v2681 = vadd.f32 %v2497, %v2680
        %v2682 = vpop.f32.mrb[0].mxu0
        %2683 = vmatprep.mubr.bf16.mxu0 0
        %2684 = vmatmul.mubr.bf16.gmra.mrb[0].mxu0 %v2473
        %v2685 = vpop.f32.mrb[0].mxu0
        %v2686 = vadd.f32 %v2497, %v2685
        %v2687 = vpop.f32.mrb[0].mxu0
        %v2688 = vpop.f32.mrb[0].mxu0
        %v2689 = vadd.f32 %v2497, %v2688
        %v2690 = vpop.f32.mrb[0].mxu0
        %2691 = vmatprep.mubr.bf16.mxu0 0
        %2692 = vmatmul.mubr.bf16.gmra.mrb[0].mxu0 %v2474
        %v2693 = vpop.f32.mrb[0].mxu0
        %v2694 = vadd.f32 %v2497, %v2693
        %v2695 = vpop.f32.mrb[0].mxu0
        %v2696 = vpop.f32.mrb[0].mxu0
        %v2697 = vadd.f32 %v2497, %v2696
        %v2698 = vpop.f32.mrb[0].mxu0
        %2699 = vmatprep.mubr.bf16.mxu0 0
        %2700 = vmatmul.mubr.bf16.gmra.mrb[0].mxu0 %v2475
        %v2701 = vpop.f32.mrb[0].mxu0
        %v2702 = vadd.f32 %v2497, %v2701
        %v2703 = vpop.f32.mrb[0].mxu0
        %v2704 = vpop.f32.mrb[0].mxu0
        %v2705 = vadd.f32 %v2497, %v2704
        %v2706 = vpop.f32.mrb[0].mxu0
        %2707 = vdwg.mxu0
        %2708 = vmax.xlane.f32.xlu0 %v2582
        %v2709 = vpop.xlane.xlu0 %2708
        %2710 = vmax.xlane.f32.xlu0 %v2585
        %v2711 = vpop.xlane.xlu0 %2710
        %2712 = vmax.xlane.f32.xlu0 %v2590
        %v2713 = vpop.xlane.xlu0 %2712
        %2714 = vmax.xlane.f32.xlu0 %v2593
        %v2715 = vpop.xlane.xlu0 %2714
        %2716 = vmax.xlane.f32.xlu0 %v2598
        %v2717 = vpop.xlane.xlu0 %2716
        %2718 = vmax.xlane.f32.xlu0 %v2601
        %v2719 = vpop.xlane.xlu0 %2718
        %2720 = vmax.xlane.f32.xlu0 %v2606
        %v2721 = vpop.xlane.xlu0 %2720
        %2722 = vmax.xlane.f32.xlu0 %v2609
        %v2723 = vpop.xlane.xlu0 %2722
        %2724 = vmax.xlane.f32.xlu0 %v2614
        %v2725 = vpop.xlane.xlu0 %2724
        %2726 = vmax.xlane.f32.xlu0 %v2617
        %v2727 = vpop.xlane.xlu0 %2726
        %2728 = vmax.xlane.f32.xlu0 %v2622
        %v2729 = vpop.xlane.xlu0 %2728
        %2730 = vmax.xlane.f32.xlu0 %v2625
        %v2731 = vpop.xlane.xlu0 %2730
        %2732 = vmax.xlane.f32.xlu0 %v2630
        %v2733 = vpop.xlane.xlu0 %2732
        %2734 = vmax.xlane.f32.xlu0 %v2633
        %v2735 = vpop.xlane.xlu0 %2734
        %2736 = vmax.xlane.f32.xlu0 %v2638
        %v2737 = vpop.xlane.xlu0 %2736
        %2738 = vmax.xlane.f32.xlu0 %v2641
        %v2739 = vpop.xlane.xlu0 %2738
        %2740 = vmax.xlane.f32.xlu0 %v2646
        %v2741 = vpop.xlane.xlu0 %2740
        %2742 = vmax.xlane.f32.xlu0 %v2649
        %v2743 = vpop.xlane.xlu0 %2742
        %2744 = vmax.xlane.f32.xlu0 %v2654
        %v2745 = vpop.xlane.xlu0 %2744
        %2746 = vmax.xlane.f32.xlu0 %v2657
        %v2747 = vpop.xlane.xlu0 %2746
        %2748 = vmax.xlane.f32.xlu0 %v2662
        %v2749 = vpop.xlane.xlu0 %2748
        %2750 = vmax.xlane.f32.xlu0 %v2665
        %v2751 = vpop.xlane.xlu0 %2750
        %2752 = vmax.xlane.f32.xlu0 %v2670
        %v2753 = vpop.xlane.xlu0 %2752
        %2754 = vmax.xlane.f32.xlu0 %v2673
        %v2755 = vpop.xlane.xlu0 %2754
        %2756 = vmax.xlane.f32.xlu0 %v2678
        %v2757 = vpop.xlane.xlu0 %2756
        %2758 = vmax.xlane.f32.xlu0 %v2681
        %v2759 = vpop.xlane.xlu0 %2758
        %2760 = vmax.xlane.f32.xlu0 %v2686
        %v2761 = vpop.xlane.xlu0 %2760
        %2762 = vmax.xlane.f32.xlu0 %v2689
        %v2763 = vpop.xlane.xlu0 %2762
        %2764 = vmax.xlane.f32.xlu0 %v2694
        %v2765 = vpop.xlane.xlu0 %2764
        %2766 = vmax.xlane.f32.xlu0 %v2697
        %v2767 = vpop.xlane.xlu0 %2766
        %2768 = vmax.xlane.f32.xlu0 %v2702
        %v2769 = vpop.xlane.xlu0 %2768
        %2770 = vmax.xlane.f32.xlu0 %v2705
        %v2771 = vpop.xlane.xlu0 %2770
        %v2772 = vsub.f32 %v2582, %v2709
        %v2773 = vsub.f32 %v2585, %v2711
        %v2774 = vsub.f32 %v2590, %v2713
        %v2775 = vsub.f32 %v2593, %v2715
        %v2776 = vsub.f32 %v2598, %v2717
        %v2777 = vsub.f32 %v2601, %v2719
        %v2778 = vsub.f32 %v2606, %v2721
        %v2779 = vsub.f32 %v2609, %v2723
        %v2780 = vsub.f32 %v2614, %v2725
        %v2781 = vsub.f32 %v2617, %v2727
        %v2782 = vsub.f32 %v2622, %v2729
        %v2783 = vsub.f32 %v2625, %v2731
        %v2784 = vsub.f32 %v2630, %v2733
        %v2785 = vsub.f32 %v2633, %v2735
        %v2786 = vsub.f32 %v2638, %v2737
        %v2787 = vsub.f32 %v2641, %v2739
        %v2788 = vsub.f32 %v2646, %v2741
        %v2789 = vsub.f32 %v2649, %v2743
        %v2790 = vsub.f32 %v2654, %v2745
        %v2791 = vsub.f32 %v2657, %v2747
        %v2792 = vsub.f32 %v2662, %v2749
        %v2793 = vsub.f32 %v2665, %v2751
        %v2794 = vsub.f32 %v2670, %v2753
        %v2795 = vsub.f32 %v2673, %v2755
        %v2796 = vsub.f32 %v2678, %v2757
        %v2797 = vsub.f32 %v2681, %v2759
        %v2798 = vsub.f32 %v2686, %v2761
        %v2799 = vsub.f32 %v2689, %v2763
        %v2800 = vsub.f32 %v2694, %v2765
        %v2801 = vsub.f32 %v2697, %v2767
        %v2802 = vsub.f32 %v2702, %v2769
        %v2803 = vsub.f32 %v2705, %v2771
        %v2804 = vmul.f32 %v2772, 1.442695
        %v2805 = vpow.pop %v2804
        %v2806 = vmul.f32 %v2773, 1.442695
        %v2807 = vpow.pop %v2806
        %v2808 = vmul.f32 %v2774, 1.442695
        %v2809 = vpow.pop %v2808
        %v2810 = vmul.f32 %v2775, 1.442695
        %v2811 = vpow.pop %v2810
        %v2812 = vmul.f32 %v2776, 1.442695
        %v2813 = vpow.pop %v2812
        %v2814 = vmul.f32 %v2777, 1.442695
        %v2815 = vpow.pop %v2814
        %v2816 = vmul.f32 %v2778, 1.442695
        %v2817 = vpow.pop %v2816
        %v2818 = vmul.f32 %v2779, 1.442695
        %v2819 = vpow.pop %v2818
        %v2820 = vmul.f32 %v2780, 1.442695
        %v2821 = vpow.pop %v2820
        %v2822 = vmul.f32 %v2781, 1.442695
        %v2823 = vpow.pop %v2822
        %v2824 = vmul.f32 %v2782, 1.442695
        %v2825 = vpow.pop %v2824
        %v2826 = vmul.f32 %v2783, 1.442695
        %v2827 = vpow.pop %v2826
        %v2828 = vmul.f32 %v2784, 1.442695
        %v2829 = vpow.pop %v2828
        %v2830 = vmul.f32 %v2785, 1.442695
        %v2831 = vpow.pop %v2830
        %v2832 = vmul.f32 %v2786, 1.442695
        %v2833 = vpow.pop %v2832
        %v2834 = vmul.f32 %v2787, 1.442695
        %v2835 = vpow.pop %v2834
        %v2836 = vmul.f32 %v2788, 1.442695
        %v2837 = vpow.pop %v2836
        %v2838 = vmul.f32 %v2789, 1.442695
        %v2839 = vpow.pop %v2838
        %v2840 = vmul.f32 %v2790, 1.442695
        %v2841 = vpow.pop %v2840
        %v2842 = vmul.f32 %v2791, 1.442695
        %v2843 = vpow.pop %v2842
        %v2844 = vmul.f32 %v2792, 1.442695
        %v2845 = vpow.pop %v2844
        %v2846 = vmul.f32 %v2793, 1.442695
        %v2847 = vpow.pop %v2846
        %v2848 = vmul.f32 %v2794, 1.442695
        %v2849 = vpow.pop %v2848
        %v2850 = vmul.f32 %v2795, 1.442695
        %v2851 = vpow.pop %v2850
        %v2852 = vmul.f32 %v2796, 1.442695
        %v2853 = vpow.pop %v2852
        %v2854 = vmul.f32 %v2797, 1.442695
        %v2855 = vpow.pop %v2854
        %v2856 = vmul.f32 %v2798, 1.442695
        %v2857 = vpow.pop %v2856
        %v2858 = vmul.f32 %v2799, 1.442695
        %v2859 = vpow.pop %v2858
        %v2860 = vmul.f32 %v2800, 1.442695
        %v2861 = vpow.pop %v2860
        %v2862 = vmul.f32 %v2801, 1.442695
        %v2863 = vpow.pop %v2862
        %v2864 = vmul.f32 %v2802, 1.442695
        %v2865 = vpow.pop %v2864
        %v2866 = vmul.f32 %v2803, 1.442695
        %v2867 = vpow.pop %v2866
        %2868 = vadd.xlane.f32.xlu0 %v2805
        %v2869 = vpop.xlane.xlu0 %2868
        %2870 = vadd.xlane.f32.xlu0 %v2807
        %v2871 = vpop.xlane.xlu0 %2870
        %2872 = vadd.xlane.f32.xlu0 %v2809
        %v2873 = vpop.xlane.xlu0 %2872
        %2874 = vadd.xlane.f32.xlu0 %v2811
        %v2875 = vpop.xlane.xlu0 %2874
        %2876 = vadd.xlane.f32.xlu0 %v2813
        %v2877 = vpop.xlane.xlu0 %2876
        %2878 = vadd.xlane.f32.xlu0 %v2815
        %v2879 = vpop.xlane.xlu0 %2878
        %2880 = vadd.xlane.f32.xlu0 %v2817
        %v2881 = vpop.xlane.xlu0 %2880
        %2882 = vadd.xlane.f32.xlu0 %v2819
        %v2883 = vpop.xlane.xlu0 %2882
        %2884 = vadd.xlane.f32.xlu0 %v2821
        %v2885 = vpop.xlane.xlu0 %2884
        %2886 = vadd.xlane.f32.xlu0 %v2823
        %v2887 = vpop.xlane.xlu0 %2886
        %2888 = vadd.xlane.f32.xlu0 %v2825
        %v2889 = vpop.xlane.xlu0 %2888
        %2890 = vadd.xlane.f32.xlu0 %v2827
        %v2891 = vpop.xlane.xlu0 %2890
        %2892 = vadd.xlane.f32.xlu0 %v2829
        %v2893 = vpop.xlane.xlu0 %2892
        %2894 = vadd.xlane.f32.xlu0 %v2831
        %v2895 = vpop.xlane.xlu0 %2894
        %2896 = vadd.xlane.f32.xlu0 %v2833
        %v2897 = vpop.xlane.xlu0 %2896
        %2898 = vadd.xlane.f32.xlu0 %v2835
        %v2899 = vpop.xlane.xlu0 %2898
        %2900 = vadd.xlane.f32.xlu0 %v2837
        %v2901 = vpop.xlane.xlu0 %2900
        %2902 = vadd.xlane.f32.xlu0 %v2839
        %v2903 = vpop.xlane.xlu0 %2902
        %2904 = vadd.xlane.f32.xlu0 %v2841
        %v2905 = vpop.xlane.xlu0 %2904
        %2906 = vadd.xlane.f32.xlu0 %v2843
        %v2907 = vpop.xlane.xlu0 %2906
        %2908 = vadd.xlane.f32.xlu0 %v2845
        %v2909 = vpop.xlane.xlu0 %2908
        %2910 = vadd.xlane.f32.xlu0 %v2847
        %v2911 = vpop.xlane.xlu0 %2910
        %2912 = vadd.xlane.f32.xlu0 %v2849
        %v2913 = vpop.xlane.xlu0 %2912
        %2914 = vadd.xlane.f32.xlu0 %v2851
        %v2915 = vpop.xlane.xlu0 %2914
        %2916 = vadd.xlane.f32.xlu0 %v2853
        %v2917 = vpop.xlane.xlu0 %2916
        %2918 = vadd.xlane.f32.xlu0 %v2855
        %v2919 = vpop.xlane.xlu0 %2918
        %2920 = vadd.xlane.f32.xlu0 %v2857
        %v2921 = vpop.xlane.xlu0 %2920
        %2922 = vadd.xlane.f32.xlu0 %v2859
        %v2923 = vpop.xlane.xlu0 %2922
        %2924 = vadd.xlane.f32.xlu0 %v2861
        %v2925 = vpop.xlane.xlu0 %2924
        %2926 = vadd.xlane.f32.xlu0 %v2863
        %v2927 = vpop.xlane.xlu0 %2926
        %2928 = vadd.xlane.f32.xlu0 %v2865
        %v2929 = vpop.xlane.xlu0 %2928
        %2930 = vadd.xlane.f32.xlu0 %v2867
        %v2931 = vpop.xlane.xlu0 %2930
        %v2932 = vrcp.pop %v2869
        %v2933 = vrcp.pop %v2871
        %v2934 = vrcp.pop %v2873
        %v2935 = vrcp.pop %v2875
        %v2936 = vrcp.pop %v2877
        %v2937 = vrcp.pop %v2879
        %v2938 = vrcp.pop %v2881
        %v2939 = vrcp.pop %v2883
        %v2940 = vrcp.pop %v2885
        %v2941 = vrcp.pop %v2887
        %v2942 = vrcp.pop %v2889
        %v2943 = vrcp.pop %v2891
        %v2944 = vrcp.pop %v2893
        %v2945 = vrcp.pop %v2895
        %v2946 = vrcp.pop %v2897
        %v2947 = vrcp.pop %v2899
        %v2948 = vrcp.pop %v2901
        %v2949 = vrcp.pop %v2903
        %v2950 = vrcp.pop %v2905
        %v2951 = vrcp.pop %v2907
        %v2952 = vrcp.pop %v2909
        %v2953 = vrcp.pop %v2911
        %v2954 = vrcp.pop %v2913
        %v2955 = vrcp.pop %v2915
        %v2956 = vrcp.pop %v2917
        %v2957 = vrcp.pop %v2919
        %v2958 = vrcp.pop %v2921
        %v2959 = vrcp.pop %v2923
        %v2960 = vrcp.pop %v2925
        %v2961 = vrcp.pop %v2927
        %v2962 = vrcp.pop %v2929
        %v2963 = vrcp.pop %v2931
        %v2964 = vmul.f32 %v2805, %v2932
        %v2965 = vmul.f32 %v2807, %v2933
        %v2966 = vmul.f32 %v2809, %v2934
        %v2967 = vmul.f32 %v2811, %v2935
        %v2968 = vmul.f32 %v2813, %v2936
        %v2969 = vmul.f32 %v2815, %v2937
        %v2970 = vmul.f32 %v2817, %v2938
        %v2971 = vmul.f32 %v2819, %v2939
        %v2972 = vmul.f32 %v2821, %v2940
        %v2973 = vmul.f32 %v2823, %v2941
        %v2974 = vmul.f32 %v2825, %v2942
        %v2975 = vmul.f32 %v2827, %v2943
        %v2976 = vmul.f32 %v2829, %v2944
        %v2977 = vmul.f32 %v2831, %v2945
        %v2978 = vmul.f32 %v2833, %v2946
        %v2979 = vmul.f32 %v2835, %v2947
        %v2980 = vmul.f32 %v2837, %v2948
        %v2981 = vmul.f32 %v2839, %v2949
        %v2982 = vmul.f32 %v2841, %v2950
        %v2983 = vmul.f32 %v2843, %v2951
        %v2984 = vmul.f32 %v2845, %v2952
        %v2985 = vmul.f32 %v2847, %v2953
        %v2986 = vmul.f32 %v2849, %v2954
        %v2987 = vmul.f32 %v2851, %v2955
        %v2988 = vmul.f32 %v2853, %v2956
        %v2989 = vmul.f32 %v2855, %v2957
        %v2990 = vmul.f32 %v2857, %v2958
        %v2991 = vmul.f32 %v2859, %v2959
        %v2992 = vmul.f32 %v2861, %v2960
        %v2993 = vmul.f32 %v2863, %v2961
        %v2994 = vmul.f32 %v2865, %v2962
        %v2995 = vmul.f32 %v2867, %v2963
        %2996 = vst [vmem:[%s341] sm:$0xff] %v2964
        %2997 = vst [vmem:[%s341 + $0x8] sm:$0xff] %v2965
        %2998 = vst [vmem:[%s341 + $0x10] sm:$0xff] %v2966
        %2999 = vst [vmem:[%s341 + $0x18] sm:$0xff] %v2967
        %3000 = vst [vmem:[%s341 + $0x20] sm:$0xff] %v2968
        %3001 = vst [vmem:[%s341 + $0x28] sm:$0xff] %v2969
        %3002 = vst [vmem:[%s341 + $0x30] sm:$0xff] %v2970
        %3003 = vst [vmem:[%s341 + $0x38] sm:$0xff] %v2971
        %3004 = vst [vmem:[%s341 + $0x40] sm:$0xff] %v2972
        %3005 = vst [vmem:[%s341 + $0x48] sm:$0xff] %v2973
        %3006 = vst [vmem:[%s341 + $0x50] sm:$0xff] %v2974
        %3007 = vst [vmem:[%s341 + $0x58] sm:$0xff] %v2975
        %3008 = vst [vmem:[%s341 + $0x60] sm:$0xff] %v2976
        %3009 = vst [vmem:[%s341 + $0x68] sm:$0xff] %v2977
        %3010 = vst [vmem:[%s341 + $0x70] sm:$0xff] %v2978
        %3011 = vst [vmem:[%s341 + $0x78] sm:$0xff] %v2979
        %3012 = vst [vmem:[%s341 + $0x80] sm:$0xff] %v2980
        %3013 = vst [vmem:[%s341 + $0x88] sm:$0xff] %v2981
        %3014 = vst [vmem:[%s341 + $0x90] sm:$0xff] %v2982
        %3015 = vst [vmem:[%s341 + $0x98] sm:$0xff] %v2983
        %3016 = vst [vmem:[%s341 + $0xa0] sm:$0xff] %v2984
        %3017 = vst [vmem:[%s341 + $0xa8] sm:$0xff] %v2985
        %3018 = vst [vmem:[%s341 + $0xb0] sm:$0xff] %v2986
        %3019 = vst [vmem:[%s341 + $0xb8] sm:$0xff] %v2987
        %3020 = vst [vmem:[%s341 + $0xc0] sm:$0xff] %v2988
        %3021 = vst [vmem:[%s341 + $0xc8] sm:$0xff] %v2989
        %3022 = vst [vmem:[%s341 + $0xd0] sm:$0xff] %v2990
        %3023 = vst [vmem:[%s341 + $0xd8] sm:$0xff] %v2991
        %3024 = vst [vmem:[%s341 + $0xe0] sm:$0xff] %v2992
        %3025 = vst [vmem:[%s341 + $0xe8] sm:$0xff] %v2993
        %3026 = vst [vmem:[%s341 + $0xf0] sm:$0xff] %v2994
        %3027 = vst [vmem:[%s341 + $0xf8] sm:$0xff] %v2995
        %s3028 = sand.u32 %s186, 1
        %s3029 = scalar_lea.sflag [#allocation4], %s3028
        %s3030 = sand.u32 %s186, 1
        %s3031 = smul.addr %s3030, 256
        %s3032 = scalar_lea.vmem [#allocation10], %s3031
        // Predicated region
        $region65: #{tpu_custom_call.1} parent=47 // pred_check
          %p3033 = pneg %p196
        $region66: #{tpu_custom_call.1} parent=47 // pred_check_branch
          %3035 = sbr.rel (%p3033) target = $region68
        $region67: #{tpu_custom_call.1} parent=47 // pred_region
          %s3036 = smul.u32 32, %s26
          %s3038 = ssub.s32 4096, 4096
          %3039 = vsyncadd %s3029, %s3038
          %s3040 = smul.addr %s3036, 128
          %s3041 = scalar_lea.hbm %s7, %s3040
          %s3042 = sshll.u32 %s3032, 4
          %s3043 = int_to_ptr.vmem [resolvable:$true] %s3042
          %3048 = dma.vmem_to_hbm [thread:$0]  %s3043, 4096, %s3041, %s3029, 128, 128, 8
        $region68: #{tpu_custom_call.1} parent=47 // pred_fallthru
          _
      $region48: #{tpu_custom_call.1} parent=5 // pred_fallthru
        _
      %p3049 = scmp.le.s32.totalorder 2, %s21
      // Predicated region
      $region69: #{tpu_custom_call.1} parent=5 // pred_check
        %p3050 = pneg %p3049
      $region70: #{tpu_custom_call.1} parent=5 // pred_check_branch
        %3052 = sbr.rel (%p3050) target = $region72
      $region71: #{tpu_custom_call.1} parent=5 // pred_region
        %s3053 = ssub.s32 %s21, 2
        // Predicated region
        $region73: #{tpu_custom_call.1} parent=71 // pred_check
          %p3054 = pneg %p202
        $region74: #{tpu_custom_call.1} parent=71 // pred_check_branch
          %3056 = sbr.rel (%p3054) target = $region76
        $region75: #{tpu_custom_call.1} parent=71 // pred_region
          %s3057 = sand.u32 %s187, 1
          %s3058 = scalar_lea.sflag [#allocation4], %s3057
          %s3059 = sand.u32 %s187, 1
          %s3060 = smul.addr %s3059, 256
          %s3061 = scalar_lea.vmem [#allocation10], %s3060
          %3062 = dma.done %s3058, 4096
        $region76: #{tpu_custom_call.1} parent=71 // pred_fallthru
          _
      $region72: #{tpu_custom_call.1} parent=5 // pred_fallthru
        _
    $region6: #{tpu_custom_call.1} parent=1 // loop_footer
      %s25 = sadd.s32 1, %s21
    $region7: #{tpu_custom_call.1} parent=1 // loop_footer_branch
      %20 = sbr.rel target = $region3
    $region8: #{tpu_custom_call.1} parent=1 // loop_exit
      _
    %3063 = vsyncpa [#allocation3], 1
    %s3064 = scalar_lea.sflag [#allocation3], 1
    %3065 = vsyncpa %s3064, 1
    %3066 = vsyncpa [#allocation6], 1
    %3067 = vsyncpa [#allocation9], 1
    %3068 = vsyncpa [#allocation4], 1
    %s3069 = scalar_lea.sflag [#allocation4], 1
    %3070 = vsyncpa %s3069, 1

</llo_original>
